<compile_context>
chip_gen: v6e
topology: v6e:2x2x1
jax: 0.10.0
libtpu: 0.0.40
codegen_flags: <defaults>
</compile_context>

<pallas_src>
import functools

import jax
import jax.numpy as jnp
from jax.experimental import pallas as pl
from jax.experimental.pallas import tpu as pltpu


def _spatial_attn_kernel(x_ref, pool_ref, gamma_ref, beta_ref,
                         wqkv_ref, bqkv_ref, wp_ref, bp_ref,
                         o_ref, *, eps, matmul_dtype, q_tile):
    f32 = jnp.float32
    md = matmul_dtype
    approx_recip = jnp.dtype(md) != jnp.dtype(jnp.float32)

    # ---- layout swap in VMEM: (C, N) -> (N, C); channels on lanes -------------
    x_cn = x_ref[0].astype(f32)                       # (C, N)
    x_t = jnp.transpose(x_cn)                         # (N, C), tokens on sublanes
    N, C = x_t.shape

    # ---- GroupNorm stats: exact f32 token sums + resident group-pool matmul ---
    col_sum = jnp.sum(x_t, axis=0, keepdims=True)             # (1, C)
    col_sq = jnp.sum(x_t * x_t, axis=0, keepdims=True)        # (1, C)
    mean_c = jnp.dot(col_sum, pool_ref[...], preferred_element_type=f32)   # (1, C)
    ex2_c = jnp.dot(col_sq, pool_ref[...], preferred_element_type=f32)     # (1, C)
    rstd_c = jax.lax.rsqrt(ex2_c - mean_c * mean_c + eps)
    scale_c = rstd_c * gamma_ref[...]
    shift_c = beta_ref[...] - mean_c * scale_c
    xn = x_t * scale_c + shift_c                      # single fused multiply-add pass

    # ---- fused q|k|v projection (1/sqrt(C) pre-folded into q weights/bias) ----
    qkv = jnp.dot(xn.astype(md), wqkv_ref[...],
                  preferred_element_type=f32) + bqkv_ref[...]  # (N, 3C)
    q_m = qkv[:, :C].astype(md)                       # already scaled by C**-0.5
    k_m = qkv[:, C:2 * C].astype(md)
    v_m = qkv[:, 2 * C:].astype(md)

    # ---- attention over spatial tokens, tiled over query rows -----------------
    # Only a (q_tile, N) score block is ever live; output columns are written
    # per tile so no (N, C) accumulator scratch is needed.
    # TODO(synk): stream K/V tiles with online softmax (and a second parallel
    # grid axis over q-tiles for v7x) once N*C itself outgrows VMEM
    # (e.g. 64x64 spatial at dim >= 512).
    wp = wp_ref[...]
    bp = bp_ref[...]
    n_qt = N // q_tile
    for t in range(n_qt):                             # static unroll; n_qt is small
        j0 = t * q_tile
        j1 = j0 + q_tile
        sim = jax.lax.dot_general(q_m[j0:j1, :], k_m,
                                  (((1,), (1,)), ((), ())),
                                  preferred_element_type=f32)          # (tq, N)
        sim = sim - jnp.max(sim, axis=-1, keepdims=True)
        # NOTE: on v6e/v7x exp could run on bf16 scores; kept f32 for v5e portability.
        p = jnp.exp(sim)
        row_sum = jnp.sum(p, axis=-1, keepdims=True)                   # (tq, 1)
        o_un = jnp.dot(p.astype(md), v_m, preferred_element_type=f32)  # (tq, C)
        o_t = o_un * pl.reciprocal(row_sum, approx=approx_recip)
        proj = jnp.dot(o_t.astype(md), wp, preferred_element_type=f32) + bp
        res = x_t[j0:j1, :] + proj                                     # residual
        o_ref[0, :, j0:j1] = jnp.transpose(res).astype(o_ref.dtype)    # (C, tq)


@functools.partial(jax.jit,
                   static_argnames=("num_groups", "eps", "matmul_dtype", "q_tile"))
def spatial_self_attention(x, gamma, beta, wq, bq, wk, bk, wv, bv, wp, bp,
                           *, num_groups=32, eps=1e-6,
                           matmul_dtype=jnp.bfloat16, q_tile=256):
    """x: (B, C, H, W). Conv1x1 weights in torch layout (C_out, C_in), biases (C,)."""
    B, C, H, W = x.shape
    assert C % num_groups == 0, "GroupNorm requires C % num_groups == 0"
    N = H * W
    tq = min(q_tile, N)
    assert N % tq == 0, "spatial extent must be divisible by the query tile"

    # NCHW -> (B, C, N) is a free contiguous reshape; no HBM transpose needed.
    x_cn = x.reshape(B, C, N)

    scale = float(C) ** -0.5

    def w_t(w):                                       # (C_out, C_in) -> (C_in, C_out)
        return jnp.transpose(w)

    # Fused q|k|v weight with the attention scale folded into the q slice.
    w_qkv = jnp.concatenate([w_t(wq) * scale, w_t(wk), w_t(wv)],
                            axis=1).astype(matmul_dtype)          # (C, 3C)
    b_qkv = jnp.concatenate([bq * scale, bk, bv]).reshape(1, 3 * C).astype(jnp.float32)
    wp_t = w_t(wp).astype(matmul_dtype)
    bp_row = bp.reshape(1, C).astype(jnp.float32)
    gamma_row = gamma.reshape(1, C).astype(jnp.float32)
    beta_row = beta.reshape(1, C).astype(jnp.float32)

    # Group-pooling matrix (same-group -> 1/(N*cg)), built once per call, f32.
    cg = C // num_groups
    gid = jnp.arange(C, dtype=jnp.int32) // cg
    pool = (gid[:, None] == gid[None, :]).astype(jnp.float32) * (1.0 / (N * cg))

    kernel = functools.partial(_spatial_attn_kernel, eps=eps,
                               matmul_dtype=matmul_dtype, q_tile=tq)

    # Per-step VMEM footprint estimate; raise the scoped limit only when the
    # shapes outgrow v5e's ~16 MiB default (toy shapes stay well below it).
    mm_b = jnp.dtype(matmul_dtype).itemsize
    est = (2 * 2 * C * N * x.dtype.itemsize          # in/out token blocks, double-buffered
           + 2 * (3 * C * C + C * C) * mm_b          # fused qkv + proj weights
           + 2 * C * C * 4                           # pool matrix
           + 5 * N * C * 4                           # x_t / xn / qkv f32 temporaries
           + 3 * N * C * mm_b                        # q/k/v matmul operands
           + 2 * tq * N * 4)                         # score tile (sim + exp)
    vmem_limit = None
    if est > 16 * 1024 * 1024:
        vmem_limit = int(min(1.5 * est, 64 * 1024 * 1024))

    tok_spec = pl.BlockSpec((1, C, N), lambda b: (b, 0, 0))
    out_cn = pl.pallas_call(
        kernel,
        out_shape=jax.ShapeDtypeStruct((B, C, N), x.dtype),
        grid_spec=pltpu.PrefetchScalarGridSpec(
            num_scalar_prefetch=0,
            grid=(B,),
            in_specs=[tok_spec,                                        # x
                      pl.BlockSpec((C, C), lambda b: (0, 0)),          # pool
                      pl.BlockSpec((1, C), lambda b: (0, 0)),          # gamma
                      pl.BlockSpec((1, C), lambda b: (0, 0)),          # beta
                      pl.BlockSpec((C, 3 * C), lambda b: (0, 0)),      # w_qkv
                      pl.BlockSpec((1, 3 * C), lambda b: (0, 0)),      # b_qkv
                      pl.BlockSpec((C, C), lambda b: (0, 0)),          # w_proj
                      pl.BlockSpec((1, C), lambda b: (0, 0))],         # b_proj
            out_specs=tok_spec,
        ),
        compiler_params=pltpu.CompilerParams(
            dimension_semantics=("parallel",),
            vmem_limit_bytes=vmem_limit),
    )(x_cn, pool, gamma_row, beta_row, w_qkv, b_qkv, wp_t, bp_row)

    # (B, C, N) -> NCHW is again a free reshape.
    return out_cn.reshape(B, C, H, W)


def init_spatial_attention_params(key, dim, dtype=jnp.float32):
    """Deterministic init roughly matching torch Conv2d/GroupNorm defaults."""
    ks = jax.random.split(key, 9)
    bound = 1.0 / (dim ** 0.5)

    def lin(kw, kb):
        w = jax.random.uniform(kw, (dim, dim), dtype, -bound, bound)   # (Cout, Cin)
        b = jax.random.uniform(kb, (dim,), dtype, -bound, bound)
        return w, b

    wq, bq = lin(ks[0], ks[1])
    wk, bk = lin(ks[2], ks[3])
    wv, bv = lin(ks[4], ks[5])
    wp, bp = lin(ks[6], ks[7])
    kg, kb2 = jax.random.split(ks[8])
    gamma = 1.0 + 0.1 * jax.random.normal(kg, (dim,), dtype)
    beta = 0.1 * jax.random.normal(kb2, (dim,), dtype)
    return gamma, beta, wq, bq, wk, bk, wv, bv, wp, bp


def _reference(x, gamma, beta, wq, bq, wk, bk, wv, bv, wp, bp,
               *, num_groups=32, eps=1e-6):
    """Pure-JAX reference mirroring the torch module's forward."""
    B, C, H, W = x.shape
    hi = jax.lax.Precision.HIGHEST
    xg = x.reshape(B, num_groups, C // num_groups, H, W)
    mean = xg.mean(axis=(2, 3, 4), keepdims=True)
    var = xg.var(axis=(2, 3, 4), keepdims=True)
    hn = ((xg - mean) * jax.lax.rsqrt(var + eps)).reshape(B, C, H, W)
    hn = hn * gamma[None, :, None, None] + beta[None, :, None, None]

    def conv1x1(t, w, b):
        return jnp.einsum('bchw,oc->bohw', t, w,
                          precision=hi) + b[None, :, None, None]

    q = conv1x1(hn, wq, bq)
    k = conv1x1(hn, wk, bk)
    v = conv1x1(hn, wv, bv)
    N = H * W
    qs = q.reshape(B, C, N).transpose(0, 2, 1)          # b (h w) c
    ks = k.reshape(B, C, N)                             # b c (h w)
    sim = jnp.einsum('bic,bcj->bij', qs, ks, precision=hi) * (int(C) ** -0.5)
    attn = jax.nn.softmax(sim, axis=2)
    vs = v.reshape(B, C, N)
    out = jnp.einsum('bcj,bij->bci', vs, attn, precision=hi)
    out = conv1x1(out.reshape(B, C, H, W), wp, bp)
    return x + out


if __name__ == "__main__":
    key = jax.random.PRNGKey(0)
    kx, kp = jax.random.split(key)

    # dim must be a multiple of 32 for GroupNorm(32); 128 keeps the channel
    # (lane) axis dense.  N = 16*16 = 256 tokens; q_tile=128 exercises the
    # query-tiled attention loop (2 tiles per batch element).
    B, C, H, W = 2, 128, 16, 16
    x = jax.random.normal(kx, (B, C, H, W), dtype=jnp.float32)
    params = init_spatial_attention_params(kp, C)

    # Performance path: bf16 MXU operands, f32 accumulation, approx reciprocal.
    out = spatial_self_attention(x, *params, matmul_dtype=jnp.bfloat16, q_tile=128)
    out = jax.block_until_ready(out)

    # f32 path for a tighter numerical check of the fused math.
    out_f32 = spatial_self_attention(x, *params, matmul_dtype=jnp.float32, q_tile=128)
    out_f32 = jax.block_until_ready(out_f32)

    ref = _reference(x, *params)
    assert out.shape == (B, C, H, W), out.shape
    err_f32 = float(jnp.max(jnp.abs(out_f32 - ref)))
    err_bf16 = float(jnp.max(jnp.abs(out - ref)))
    assert err_f32 < 1e-2, f"f32 max abs err {err_f32}"
    assert err_bf16 < 1.5e-1, f"bf16 max abs err {err_bf16}"

    print("KERNEL_OK")
</pallas_src>

<mosaic_0001>
module attributes {stable_mosaic.version = 11 : i64} {
  func.func @_spatial_attn_kernel(%arg0: i32, %arg1: memref<1x128x256xf32, #tpu.memory_space<vmem>>, %arg2: memref<128x128xf32, #tpu.memory_space<vmem>>, %arg3: memref<1x128xf32, #tpu.memory_space<vmem>>, %arg4: memref<1x128xf32, #tpu.memory_space<vmem>>, %arg5: memref<128x384xbf16, #tpu.memory_space<vmem>>, %arg6: memref<1x384xf32, #tpu.memory_space<vmem>>, %arg7: memref<128x128xbf16, #tpu.memory_space<vmem>>, %arg8: memref<1x128xf32, #tpu.memory_space<vmem>>, %arg9: memref<1x128x256xf32, #tpu.memory_space<vmem>>) attributes {dimension_semantics = [#tpu.dimension_semantics<parallel>], iteration_bounds = array<i64: 2>, scalar_prefetch = 0 : i64, scratch_operands = 0 : i64, tpu.core_type = #tpu.core_type<tc>, window_params = [{transform_indices = @transform_0, window_bounds = array<i64: 1, 128, 256>}, {pipeline_mode = #tpu.pipeline_mode<synchronous>, transform_indices = @transform_1, window_bounds = array<i64: 128, 128>}, {pipeline_mode = #tpu.pipeline_mode<synchronous>, transform_indices = @transform_2, window_bounds = array<i64: 1, 128>}, {pipeline_mode = #tpu.pipeline_mode<synchronous>, transform_indices = @transform_3, window_bounds = array<i64: 1, 128>}, {pipeline_mode = #tpu.pipeline_mode<synchronous>, transform_indices = @transform_4, window_bounds = array<i64: 128, 384>}, {pipeline_mode = #tpu.pipeline_mode<synchronous>, transform_indices = @transform_5, window_bounds = array<i64: 1, 384>}, {pipeline_mode = #tpu.pipeline_mode<synchronous>, transform_indices = @transform_6, window_bounds = array<i64: 128, 128>}, {pipeline_mode = #tpu.pipeline_mode<synchronous>, transform_indices = @transform_7, window_bounds = array<i64: 1, 128>}, {transform_indices = @transform_8, window_bounds = array<i64: 1, 128, 256>}]} {
    %c0 = arith.constant 0 : index
    %c0_0 = arith.constant 0 : index
    %c0_1 = arith.constant 0 : index
    %0 = vector.load %arg1[%c0, %c0_0, %c0_1] : memref<1x128x256xf32, #tpu.memory_space<vmem>>, vector<1x128x256xf32>
    %1 = vector.shape_cast %0 : vector<1x128x256xf32> to vector<128x256xf32>
    %2 = tpu.transpose %1, [1, 0] : vector<128x256xf32> -> vector<256x128xf32>
    %cst = arith.constant dense<0.000000e+00> : vector<128xf32>
    %3 = vector.multi_reduction <add>, %2, %cst [0] : vector<256x128xf32> to vector<128xf32>
    %4 = vector.shape_cast %3 : vector<128xf32> to vector<1x128xf32>
    %5 = arith.mulf %2, %2 : vector<256x128xf32>
    %cst_2 = arith.constant dense<0.000000e+00> : vector<128xf32>
    %6 = vector.multi_reduction <add>, %5, %cst_2 [0] : vector<256x128xf32> to vector<128xf32>
    %7 = vector.shape_cast %6 : vector<128xf32> to vector<1x128xf32>
    %c0_3 = arith.constant 0 : index
    %c0_4 = arith.constant 0 : index
    %8 = vector.load %arg2[%c0_3, %c0_4] : memref<128x128xf32, #tpu.memory_space<vmem>>, vector<128x128xf32>
    %cst_5 = arith.constant dense<0.000000e+00> : vector<1x128xf32>
    %9 = tpu.matmul %4, %8, %cst_5 {dimension_numbers = #tpu.dot_dimension_numbers<[1], [0], [0], [1], [0, 0, 1, 1], [], []>} : vector<1x128xf32>, vector<128x128xf32>, vector<1x128xf32> -> vector<1x128xf32>
    %c0_6 = arith.constant 0 : index
    %c0_7 = arith.constant 0 : index
    %10 = vector.load %arg2[%c0_6, %c0_7] : memref<128x128xf32, #tpu.memory_space<vmem>>, vector<128x128xf32>
    %cst_8 = arith.constant dense<0.000000e+00> : vector<1x128xf32>
    %11 = tpu.matmul %7, %10, %cst_8 {dimension_numbers = #tpu.dot_dimension_numbers<[1], [0], [0], [1], [0, 0, 1, 1], [], []>} : vector<1x128xf32>, vector<128x128xf32>, vector<1x128xf32> -> vector<1x128xf32>
    %12 = arith.mulf %9, %9 : vector<1x128xf32>
    %13 = arith.subf %11, %12 : vector<1x128xf32>
    %cst_9 = arith.constant 9.99999997E-7 : f32
    %14 = vector.broadcast %cst_9 : f32 to vector<1x128xf32>
    %15 = arith.addf %13, %14 : vector<1x128xf32>
    %16 = math.rsqrt %15 : vector<1x128xf32>
    %c0_10 = arith.constant 0 : index
    %c0_11 = arith.constant 0 : index
    %17 = vector.load %arg3[%c0_10, %c0_11] : memref<1x128xf32, #tpu.memory_space<vmem>>, vector<1x128xf32>
    %18 = arith.mulf %16, %17 : vector<1x128xf32>
    %c0_12 = arith.constant 0 : index
    %c0_13 = arith.constant 0 : index
    %19 = vector.load %arg4[%c0_12, %c0_13] : memref<1x128xf32, #tpu.memory_space<vmem>>, vector<1x128xf32>
    %20 = arith.mulf %9, %18 : vector<1x128xf32>
    %21 = arith.subf %19, %20 : vector<1x128xf32>
    %22 = vector.broadcast %18 : vector<1x128xf32> to vector<256x128xf32>
    %23 = arith.mulf %2, %22 : vector<256x128xf32>
    %24 = vector.broadcast %21 : vector<1x128xf32> to vector<256x128xf32>
    %25 = arith.addf %23, %24 : vector<256x128xf32>
    %26 = arith.truncf %25 : vector<256x128xf32> to vector<256x128xbf16>
    %c0_14 = arith.constant 0 : index
    %c0_15 = arith.constant 0 : index
    %27 = vector.load %arg5[%c0_14, %c0_15] : memref<128x384xbf16, #tpu.memory_space<vmem>>, vector<128x384xbf16>
    %cst_16 = arith.constant dense<0.000000e+00> : vector<256x384xf32>
    %28 = tpu.matmul %26, %27, %cst_16 {dimension_numbers = #tpu.dot_dimension_numbers<[1], [0], [0], [1], [0, 0, 1, 1], [], []>} : vector<256x128xbf16>, vector<128x384xbf16>, vector<256x384xf32> -> vector<256x384xf32>
    %c0_17 = arith.constant 0 : index
    %c0_18 = arith.constant 0 : index
    %29 = vector.load %arg6[%c0_17, %c0_18] : memref<1x384xf32, #tpu.memory_space<vmem>>, vector<1x384xf32>
    %30 = vector.broadcast %29 : vector<1x384xf32> to vector<256x384xf32>
    %31 = arith.addf %28, %30 : vector<256x384xf32>
    %32 = vector.extract_strided_slice %31 {offsets = [0, 0], sizes = [256, 128], strides = [1, 1]} : vector<256x384xf32> to vector<256x128xf32>
    %33 = arith.truncf %32 : vector<256x128xf32> to vector<256x128xbf16>
    %34 = vector.extract_strided_slice %31 {offsets = [0, 128], sizes = [256, 128], strides = [1, 1]} : vector<256x384xf32> to vector<256x128xf32>
    %35 = arith.truncf %34 : vector<256x128xf32> to vector<256x128xbf16>
    %36 = vector.extract_strided_slice %31 {offsets = [0, 256], sizes = [256, 128], strides = [1, 1]} : vector<256x384xf32> to vector<256x128xf32>
    %37 = arith.truncf %36 : vector<256x128xf32> to vector<256x128xbf16>
    %c0_19 = arith.constant 0 : index
    %c0_20 = arith.constant 0 : index
    %38 = vector.load %arg7[%c0_19, %c0_20] : memref<128x128xbf16, #tpu.memory_space<vmem>>, vector<128x128xbf16>
    %c0_21 = arith.constant 0 : index
    %c0_22 = arith.constant 0 : index
    %39 = vector.load %arg8[%c0_21, %c0_22] : memref<1x128xf32, #tpu.memory_space<vmem>>, vector<1x128xf32>
    %40 = vector.extract_strided_slice %33 {offsets = [0, 0], sizes = [128, 128], strides = [1, 1]} : vector<256x128xbf16> to vector<128x128xbf16>
    %cst_23 = arith.constant dense<0.000000e+00> : vector<128x256xf32>
    %41 = tpu.matmul %40, %35, %cst_23 {dimension_numbers = #tpu.dot_dimension_numbers<[1], [1], [0], [0], [0, 0, 1, 0], [], []>} : vector<128x128xbf16>, vector<256x128xbf16>, vector<128x256xf32> -> vector<128x256xf32>
    %cst_24 = arith.constant dense<0xFF800000> : vector<128xf32>
    %42 = vector.multi_reduction <maximumf>, %41, %cst_24 [1] : vector<128x256xf32> to vector<128xf32>
    %43 = vector.shape_cast %42 : vector<128xf32> to vector<128x1xf32>
    %44 = vector.broadcast %43 : vector<128x1xf32> to vector<128x256xf32>
    %45 = arith.subf %41, %44 : vector<128x256xf32>
    %46 = math.exp %45 : vector<128x256xf32>
    %cst_25 = arith.constant dense<0.000000e+00> : vector<128xf32>
    %47 = vector.multi_reduction <add>, %46, %cst_25 [1] : vector<128x256xf32> to vector<128xf32>
    %48 = vector.shape_cast %47 : vector<128xf32> to vector<128x1xf32>
    %49 = arith.truncf %46 : vector<128x256xf32> to vector<128x256xbf16>
    %cst_26 = arith.constant dense<0.000000e+00> : vector<128x128xf32>
    %50 = tpu.matmul %49, %37, %cst_26 {dimension_numbers = #tpu.dot_dimension_numbers<[1], [0], [0], [1], [0, 0, 1, 1], [], []>} : vector<128x256xbf16>, vector<256x128xbf16>, vector<128x128xf32> -> vector<128x128xf32>
    %51 = tpu.reciprocal %48 {approx = true} : vector<128x1xf32> -> vector<128x1xf32>
    %52 = vector.broadcast %51 : vector<128x1xf32> to vector<128x128xf32>
    %53 = arith.mulf %50, %52 : vector<128x128xf32>
    %54 = arith.truncf %53 : vector<128x128xf32> to vector<128x128xbf16>
    %cst_27 = arith.constant dense<0.000000e+00> : vector<128x128xf32>
    %55 = tpu.matmul %54, %38, %cst_27 {dimension_numbers = #tpu.dot_dimension_numbers<[1], [0], [0], [1], [0, 0, 1, 1], [], []>} : vector<128x128xbf16>, vector<128x128xbf16>, vector<128x128xf32> -> vector<128x128xf32>
    %56 = vector.broadcast %39 : vector<1x128xf32> to vector<128x128xf32>
    %57 = arith.addf %55, %56 : vector<128x128xf32>
    %58 = vector.extract_strided_slice %2 {offsets = [0, 0], sizes = [128, 128], strides = [1, 1]} : vector<256x128xf32> to vector<128x128xf32>
    %59 = arith.addf %58, %57 : vector<128x128xf32>
    %60 = tpu.transpose %59, [1, 0] : vector<128x128xf32> -> vector<128x128xf32>
    %c0_28 = arith.constant 0 : index
    %c0_29 = arith.constant 0 : index
    %c0_30 = arith.constant 0 : index
    %61 = vector.load %arg9[%c0_28, %c0_29, %c0_30] : memref<1x128x256xf32, #tpu.memory_space<vmem>>, vector<1x128x128xf32>
    %62 = vector.shape_cast %61 : vector<1x128x128xf32> to vector<128x128xf32>
    %63 = vector.shape_cast %60 : vector<128x128xf32> to vector<1x128x128xf32>
    tpu.vector_store %arg9[%c0_28, %c0_29, %c0_30], %63 {strides = array<i32>} : memref<1x128x256xf32, #tpu.memory_space<vmem>>, vector<1x128x128xf32>,
    %64 = vector.extract_strided_slice %33 {offsets = [128, 0], sizes = [128, 128], strides = [1, 1]} : vector<256x128xbf16> to vector<128x128xbf16>
    %cst_31 = arith.constant dense<0.000000e+00> : vector<128x256xf32>
    %65 = tpu.matmul %64, %35, %cst_31 {dimension_numbers = #tpu.dot_dimension_numbers<[1], [1], [0], [0], [0, 0, 1, 0], [], []>} : vector<128x128xbf16>, vector<256x128xbf16>, vector<128x256xf32> -> vector<128x256xf32>
    %cst_32 = arith.constant dense<0xFF800000> : vector<128xf32>
    %66 = vector.multi_reduction <maximumf>, %65, %cst_32 [1] : vector<128x256xf32> to vector<128xf32>
    %67 = vector.shape_cast %66 : vector<128xf32> to vector<128x1xf32>
    %68 = vector.broadcast %67 : vector<128x1xf32> to vector<128x256xf32>
    %69 = arith.subf %65, %68 : vector<128x256xf32>
    %70 = math.exp %69 : vector<128x256xf32>
    %cst_33 = arith.constant dense<0.000000e+00> : vector<128xf32>
    %71 = vector.multi_reduction <add>, %70, %cst_33 [1] : vector<128x256xf32> to vector<128xf32>
    %72 = vector.shape_cast %71 : vector<128xf32> to vector<128x1xf32>
    %73 = arith.truncf %70 : vector<128x256xf32> to vector<128x256xbf16>
    %cst_34 = arith.constant dense<0.000000e+00> : vector<128x128xf32>
    %74 = tpu.matmul %73, %37, %cst_34 {dimension_numbers = #tpu.dot_dimension_numbers<[1], [0], [0], [1], [0, 0, 1, 1], [], []>} : vector<128x256xbf16>, vector<256x128xbf16>, vector<128x128xf32> -> vector<128x128xf32>
    %75 = tpu.reciprocal %72 {approx = true} : vector<128x1xf32> -> vector<128x1xf32>
    %76 = vector.broadcast %75 : vector<128x1xf32> to vector<128x128xf32>
    %77 = arith.mulf %74, %76 : vector<128x128xf32>
    %78 = arith.truncf %77 : vector<128x128xf32> to vector<128x128xbf16>
    %cst_35 = arith.constant dense<0.000000e+00> : vector<128x128xf32>
    %79 = tpu.matmul %78, %38, %cst_35 {dimension_numbers = #tpu.dot_dimension_numbers<[1], [0], [0], [1], [0, 0, 1, 1], [], []>} : vector<128x128xbf16>, vector<128x128xbf16>, vector<128x128xf32> -> vector<128x128xf32>
    %80 = vector.broadcast %39 : vector<1x128xf32> to vector<128x128xf32>
    %81 = arith.addf %79, %80 : vector<128x128xf32>
    %82 = vector.extract_strided_slice %2 {offsets = [128, 0], sizes = [128, 128], strides = [1, 1]} : vector<256x128xf32> to vector<128x128xf32>
    %83 = arith.addf %82, %81 : vector<128x128xf32>
    %84 = tpu.transpose %83, [1, 0] : vector<128x128xf32> -> vector<128x128xf32>
    %c0_36 = arith.constant 0 : index
    %c0_37 = arith.constant 0 : index
    %c128 = arith.constant 128 : index
    %85 = vector.load %arg9[%c0_36, %c0_37, %c128] : memref<1x128x256xf32, #tpu.memory_space<vmem>>, vector<1x128x128xf32>
    %86 = vector.shape_cast %85 : vector<1x128x128xf32> to vector<128x128xf32>
    %87 = vector.shape_cast %84 : vector<128x128xf32> to vector<1x128x128xf32>
    tpu.vector_store %arg9[%c0_36, %c0_37, %c128], %87 {strides = array<i32>} : memref<1x128x256xf32, #tpu.memory_space<vmem>>, vector<1x128x128xf32>,
    return
  }
  func.func @transform_0(%arg0: i32) -> (i32, i32, i32) {
    %c0_i32 = arith.constant 0 : i32
    %c0_i32_0 = arith.constant 0 : i32
    %c0_i32_1 = arith.constant 0 : i32
    return %arg0, %c0_i32, %c0_i32_0 : i32, i32, i32
  }
  func.func @transform_1(%arg0: i32) -> (i32, i32) {
    %c0_i32 = arith.constant 0 : i32
    %c0_i32_0 = arith.constant 0 : i32
    %c0_i32_1 = arith.constant 0 : i32
    return %c0_i32, %c0_i32_0 : i32, i32
  }
  func.func @transform_2(%arg0: i32) -> (i32, i32) {
    %c0_i32 = arith.constant 0 : i32
    %c0_i32_0 = arith.constant 0 : i32
    %c0_i32_1 = arith.constant 0 : i32
    return %c0_i32, %c0_i32_0 : i32, i32
  }
  func.func @transform_3(%arg0: i32) -> (i32, i32) {
    %c0_i32 = arith.constant 0 : i32
    %c0_i32_0 = arith.constant 0 : i32
    %c0_i32_1 = arith.constant 0 : i32
    return %c0_i32, %c0_i32_0 : i32, i32
  }
  func.func @transform_4(%arg0: i32) -> (i32, i32) {
    %c0_i32 = arith.constant 0 : i32
    %c0_i32_0 = arith.constant 0 : i32
    %c0_i32_1 = arith.constant 0 : i32
    return %c0_i32, %c0_i32_0 : i32, i32
  }
  func.func @transform_5(%arg0: i32) -> (i32, i32) {
    %c0_i32 = arith.constant 0 : i32
    %c0_i32_0 = arith.constant 0 : i32
    %c0_i32_1 = arith.constant 0 : i32
    return %c0_i32, %c0_i32_0 : i32, i32
  }
  func.func @transform_6(%arg0: i32) -> (i32, i32) {
    %c0_i32 = arith.constant 0 : i32
    %c0_i32_0 = arith.constant 0 : i32
    %c0_i32_1 = arith.constant 0 : i32
    return %c0_i32, %c0_i32_0 : i32, i32
  }
  func.func @transform_7(%arg0: i32) -> (i32, i32) {
    %c0_i32 = arith.constant 0 : i32
    %c0_i32_0 = arith.constant 0 : i32
    %c0_i32_1 = arith.constant 0 : i32
    return %c0_i32, %c0_i32_0 : i32, i32
  }
  func.func @transform_8(%arg0: i32) -> (i32, i32, i32) {
    %c0_i32 = arith.constant 0 : i32
    %c0_i32_0 = arith.constant 0 : i32
    %c0_i32_1 = arith.constant 0 : i32
    return %arg0, %c0_i32, %c0_i32_0 : i32, i32, i32
  }
}

</mosaic_0001>

<llo_original>
// kernel: spatial_self_attention.1
$region0: #{spatial_self_attention.1}
  #allocation0 [shape = 'u32[]', space=smem, size = 0x4, offset = 0x4, fixed_abs, tag = 'smem constant byte address 0x4 - core index']
  #allocation1 [shape = 'u32[144,128]{1,0:T(1,128)}', space=vmem, size = 0x12000, scoped, tag = 'internal scratch']
  %s0 = inlined_call_operand.vmem [shape: f32[2,128,256], index: 0, kind: input, shape index: {}]
  %s1 = inlined_call_operand.vmem [shape: f32[128,128], index: 1, kind: input, shape index: {}]
  %s2 = inlined_call_operand.vmem [shape: f32[1,128], index: 2, kind: input, shape index: {}]
  %s3 = inlined_call_operand.vmem [shape: f32[1,128], index: 3, kind: input, shape index: {}]
  %s4 = inlined_call_operand.vmem [shape: bf16[128,384], index: 4, kind: input, shape index: {}]
  %s5 = inlined_call_operand.vmem [shape: f32[1,384], index: 5, kind: input, shape index: {}]
  %s6 = inlined_call_operand.vmem [shape: bf16[128,128], index: 6, kind: input, shape index: {}]
  %s7 = inlined_call_operand.vmem [shape: f32[1,128], index: 7, kind: input, shape index: {}]
  %s8 = inlined_call_operand.vmem [shape: f32[2,128,256], index: 8, kind: output, shape index: {}]
  %s9 = sld [smem:[#allocation0]]
  $region65: #{spatial_self_attention.1} parent=0
    _
  %s11 = ssub.s32 1, %s9
  %s12 = scalar_select 0, %s11, %s9
  loop: start=0, step=1, limit=4
  $region2: #{spatial_self_attention.1} parent=0 // loop_pre_header
    _
  $region3: #{spatial_self_attention.1} parent=0 // loop_header
    %s14 = sphi 0, %s18
    %p15 = scmp.ge.s32.totalorder %s14, 4
    %s24 = sphi 0, %s26
    %s27 = sphi 0, %s24
    %s28 = sphi 0, %s27
    %s44 = sphi 0, %s28
    %s48 = sphi 0, %s48
    %s50 = sphi 0, %s48
    %s51 = sphi 0, %s50
    %s65 = sphi 0, %s51
    %s69 = sphi 0, %s69
    %s71 = sphi 0, %s69
    %s72 = sphi 0, %s71
    %s86 = sphi 0, %s72
    %s90 = sphi 0, %s90
    %s92 = sphi 0, %s90
    %s93 = sphi 0, %s92
    %s107 = sphi 0, %s93
    %s111 = sphi 0, %s111
    %s113 = sphi 0, %s111
    %s114 = sphi 0, %s113
    %s128 = sphi 0, %s114
    %s132 = sphi 0, %s132
    %s134 = sphi 0, %s132
    %s135 = sphi 0, %s134
    %s149 = sphi 0, %s135
    %s153 = sphi 0, %s153
    %s155 = sphi 0, %s153
    %s156 = sphi 0, %s155
    %s170 = sphi 0, %s156
    %s174 = sphi 0, %s174
    %s176 = sphi 0, %s174
    %s177 = sphi 0, %s176
    %s191 = sphi 0, %s177
    %s197 = sphi 0, %s199
    %s200 = sphi 0, %s197
    %s201 = sphi 0, %s200
    %s217 = sphi 0, %s201
  $region4: #{spatial_self_attention.1} parent=0 // loop_header_branch
    %17 = sbr.rel (%p15) target = $region8
  $region5: #{spatial_self_attention.1} parent=0 // loop_body
    %s19 = ssub.s32 %s14, 1
    %s20 = ssub.s32 %s14, 2
    %s21 = sadd.s32 %s14, 1
    %s22 = ssub.s32 %s14, %s21
    %p23 = scmp.eq.s32.totalorder %s22, 0
    %s25 = sadd.s32 %s24, 1
    %s26 = scalar_select %p23, %s24, %s25
    %p29 = pneg %p23
    %p30 = scmp.eq.s32.totalorder %s14, 1
    %p31 = por %p29, %p30
    %p32 = scmp.ne.s32.totalorder %s24, %s27
    %p33 = scmp.eq.s32.totalorder %s14, 0
    %p34 = por %p32, %p33
    %p35 = scmp.ne.s32.totalorder %s24, %s27
    %p36 = scmp.eq.s32.totalorder %s19, 1
    %p37 = por %p35, %p36
    %p38 = scmp.ne.s32.totalorder %s27, %s28
    %p39 = scmp.eq.s32.totalorder %s19, 0
    %p40 = por %p38, %p39
    %p41 = scmp.ne.s32.totalorder %s27, %s28
    %p42 = scmp.eq.s32.totalorder %s20, 1
    %p43 = por %p41, %p42
    %p45 = scmp.ne.s32.totalorder %s28, %s44
    %p46 = scmp.eq.s32.totalorder %s20, 0
    %p47 = por %p45, %p46
    %s49 = sadd.s32 %s48, 1
    %p52 = scmp.eq.s32.totalorder %s14, 1
    %p53 = scmp.ne.s32.totalorder %s48, %s50
    %p54 = scmp.eq.s32.totalorder %s14, 0
    %p55 = por %p53, %p54
    %p56 = scmp.ne.s32.totalorder %s48, %s50
    %p57 = scmp.eq.s32.totalorder %s19, 1
    %p58 = por %p56, %p57
    %p59 = scmp.ne.s32.totalorder %s50, %s51
    %p60 = scmp.eq.s32.totalorder %s19, 0
    %p61 = por %p59, %p60
    %p62 = scmp.ne.s32.totalorder %s50, %s51
    %p63 = scmp.eq.s32.totalorder %s20, 1
    %p64 = por %p62, %p63
    %p66 = scmp.ne.s32.totalorder %s51, %s65
    %p67 = scmp.eq.s32.totalorder %s20, 0
    %p68 = por %p66, %p67
    %s70 = sadd.s32 %s69, 1
    %p73 = scmp.eq.s32.totalorder %s14, 1
    %p74 = scmp.ne.s32.totalorder %s69, %s71
    %p75 = scmp.eq.s32.totalorder %s14, 0
    %p76 = por %p74, %p75
    %p77 = scmp.ne.s32.totalorder %s69, %s71
    %p78 = scmp.eq.s32.totalorder %s19, 1
    %p79 = por %p77, %p78
    %p80 = scmp.ne.s32.totalorder %s71, %s72
    %p81 = scmp.eq.s32.totalorder %s19, 0
    %p82 = por %p80, %p81
    %p83 = scmp.ne.s32.totalorder %s71, %s72
    %p84 = scmp.eq.s32.totalorder %s20, 1
    %p85 = por %p83, %p84
    %p87 = scmp.ne.s32.totalorder %s72, %s86
    %p88 = scmp.eq.s32.totalorder %s20, 0
    %p89 = por %p87, %p88
    %s91 = sadd.s32 %s90, 1
    %p94 = scmp.eq.s32.totalorder %s14, 1
    %p95 = scmp.ne.s32.totalorder %s90, %s92
    %p96 = scmp.eq.s32.totalorder %s14, 0
    %p97 = por %p95, %p96
    %p98 = scmp.ne.s32.totalorder %s90, %s92
    %p99 = scmp.eq.s32.totalorder %s19, 1
    %p100 = por %p98, %p99
    %p101 = scmp.ne.s32.totalorder %s92, %s93
    %p102 = scmp.eq.s32.totalorder %s19, 0
    %p103 = por %p101, %p102
    %p104 = scmp.ne.s32.totalorder %s92, %s93
    %p105 = scmp.eq.s32.totalorder %s20, 1
    %p106 = por %p104, %p105
    %p108 = scmp.ne.s32.totalorder %s93, %s107
    %p109 = scmp.eq.s32.totalorder %s20, 0
    %p110 = por %p108, %p109
    %s112 = sadd.s32 %s111, 1
    %p115 = scmp.eq.s32.totalorder %s14, 1
    %p116 = scmp.ne.s32.totalorder %s111, %s113
    %p117 = scmp.eq.s32.totalorder %s14, 0
    %p118 = por %p116, %p117
    %p119 = scmp.ne.s32.totalorder %s111, %s113
    %p120 = scmp.eq.s32.totalorder %s19, 1
    %p121 = por %p119, %p120
    %p122 = scmp.ne.s32.totalorder %s113, %s114
    %p123 = scmp.eq.s32.totalorder %s19, 0
    %p124 = por %p122, %p123
    %p125 = scmp.ne.s32.totalorder %s113, %s114
    %p126 = scmp.eq.s32.totalorder %s20, 1
    %p127 = por %p125, %p126
    %p129 = scmp.ne.s32.totalorder %s114, %s128
    %p130 = scmp.eq.s32.totalorder %s20, 0
    %p131 = por %p129, %p130
    %s133 = sadd.s32 %s132, 1
    %p136 = scmp.eq.s32.totalorder %s14, 1
    %p137 = scmp.ne.s32.totalorder %s132, %s134
    %p138 = scmp.eq.s32.totalorder %s14, 0
    %p139 = por %p137, %p138
    %p140 = scmp.ne.s32.totalorder %s132, %s134
    %p141 = scmp.eq.s32.totalorder %s19, 1
    %p142 = por %p140, %p141
    %p143 = scmp.ne.s32.totalorder %s134, %s135
    %p144 = scmp.eq.s32.totalorder %s19, 0
    %p145 = por %p143, %p144
    %p146 = scmp.ne.s32.totalorder %s134, %s135
    %p147 = scmp.eq.s32.totalorder %s20, 1
    %p148 = por %p146, %p147
    %p150 = scmp.ne.s32.totalorder %s135, %s149
    %p151 = scmp.eq.s32.totalorder %s20, 0
    %p152 = por %p150, %p151
    %s154 = sadd.s32 %s153, 1
    %p157 = scmp.eq.s32.totalorder %s14, 1
    %p158 = scmp.ne.s32.totalorder %s153, %s155
    %p159 = scmp.eq.s32.totalorder %s14, 0
    %p160 = por %p158, %p159
    %p161 = scmp.ne.s32.totalorder %s153, %s155
    %p162 = scmp.eq.s32.totalorder %s19, 1
    %p163 = por %p161, %p162
    %p164 = scmp.ne.s32.totalorder %s155, %s156
    %p165 = scmp.eq.s32.totalorder %s19, 0
    %p166 = por %p164, %p165
    %p167 = scmp.ne.s32.totalorder %s155, %s156
    %p168 = scmp.eq.s32.totalorder %s20, 1
    %p169 = por %p167, %p168
    %p171 = scmp.ne.s32.totalorder %s156, %s170
    %p172 = scmp.eq.s32.totalorder %s20, 0
    %p173 = por %p171, %p172
    %s175 = sadd.s32 %s174, 1
    %p178 = scmp.eq.s32.totalorder %s14, 1
    %p179 = scmp.ne.s32.totalorder %s174, %s176
    %p180 = scmp.eq.s32.totalorder %s14, 0
    %p181 = por %p179, %p180
    %p182 = scmp.ne.s32.totalorder %s174, %s176
    %p183 = scmp.eq.s32.totalorder %s19, 1
    %p184 = por %p182, %p183
    %p185 = scmp.ne.s32.totalorder %s176, %s177
    %p186 = scmp.eq.s32.totalorder %s19, 0
    %p187 = por %p185, %p186
    %p188 = scmp.ne.s32.totalorder %s176, %s177
    %p189 = scmp.eq.s32.totalorder %s20, 1
    %p190 = por %p188, %p189
    %p192 = scmp.ne.s32.totalorder %s177, %s191
    %p193 = scmp.eq.s32.totalorder %s20, 0
    %p194 = por %p192, %p193
    %s195 = ssub.s32 %s14, %s21
    %p196 = scmp.eq.s32.totalorder %s195, 0
    %s198 = sadd.s32 %s197, 1
    %s199 = scalar_select %p196, %s197, %s198
    %p202 = pneg %p196
    %p203 = scmp.eq.s32.totalorder %s14, 1
    %p204 = por %p202, %p203
    %p205 = scmp.ne.s32.totalorder %s197, %s200
    %p206 = scmp.eq.s32.totalorder %s14, 0
    %p207 = por %p205, %p206
    %p208 = scmp.ne.s32.totalorder %s197, %s200
    %p209 = scmp.eq.s32.totalorder %s19, 1
    %p210 = por %p208, %p209
    %p211 = scmp.ne.s32.totalorder %s200, %s201
    %p212 = scmp.eq.s32.totalorder %s19, 0
    %p213 = por %p211, %p212
    %p214 = scmp.ne.s32.totalorder %s200, %s201
    %p215 = scmp.eq.s32.totalorder %s20, 1
    %p216 = por %p214, %p215
    %p218 = scmp.ne.s32.totalorder %s201, %s217
    %p219 = scmp.eq.s32.totalorder %s20, 0
    %p220 = por %p218, %p219
    %p221 = scmp.le.s32.totalorder 1, %s14
    %p222 = scmp.lt.s32.totalorder %s14, 3
    %p223 = pnand %p221, %p222
    %p224 = pneg %p223
    // Predicated region
    $region9: #{spatial_self_attention.1} parent=5 // pred_check
      _
    $region10: #{spatial_self_attention.1} parent=5 // pred_check_branch
      %226 = sbr.rel (%p223) target = $region12
    $region11: #{spatial_self_attention.1} parent=5 // pred_region
      %s227 = ssub.s32 %s14, 1
      // Predicated region
      $region13: #{spatial_self_attention.1} parent=11 // pred_check
        %p228 = pneg %p61
      $region14: #{spatial_self_attention.1} parent=11 // pred_check_branch
        %230 = sbr.rel (%p228) target = $region16
      $region15: #{spatial_self_attention.1} parent=11 // pred_region
        _
      $region16: #{spatial_self_attention.1} parent=11 // pred_fallthru
        _
      // Predicated region
      $region17: #{spatial_self_attention.1} parent=11 // pred_check
        %p231 = pneg %p82
      $region18: #{spatial_self_attention.1} parent=11 // pred_check_branch
        %233 = sbr.rel (%p231) target = $region20
      $region19: #{spatial_self_attention.1} parent=11 // pred_region
        _
      $region20: #{spatial_self_attention.1} parent=11 // pred_fallthru
        _
      // Predicated region
      $region21: #{spatial_self_attention.1} parent=11 // pred_check
        %p234 = pneg %p103
      $region22: #{spatial_self_attention.1} parent=11 // pred_check_branch
        %236 = sbr.rel (%p234) target = $region24
      $region23: #{spatial_self_attention.1} parent=11 // pred_region
        _
      $region24: #{spatial_self_attention.1} parent=11 // pred_fallthru
        _
      // Predicated region
      $region25: #{spatial_self_attention.1} parent=11 // pred_check
        %p237 = pneg %p124
      $region26: #{spatial_self_attention.1} parent=11 // pred_check_branch
        %239 = sbr.rel (%p237) target = $region28
      $region27: #{spatial_self_attention.1} parent=11 // pred_region
        _
      $region28: #{spatial_self_attention.1} parent=11 // pred_fallthru
        _
      // Predicated region
      $region29: #{spatial_self_attention.1} parent=11 // pred_check
        %p240 = pneg %p145
      $region30: #{spatial_self_attention.1} parent=11 // pred_check_branch
        %242 = sbr.rel (%p240) target = $region32
      $region31: #{spatial_self_attention.1} parent=11 // pred_region
        _
      $region32: #{spatial_self_attention.1} parent=11 // pred_fallthru
        _
      // Predicated region
      $region33: #{spatial_self_attention.1} parent=11 // pred_check
        %p243 = pneg %p166
      $region34: #{spatial_self_attention.1} parent=11 // pred_check_branch
        %245 = sbr.rel (%p243) target = $region36
      $region35: #{spatial_self_attention.1} parent=11 // pred_region
        _
      $region36: #{spatial_self_attention.1} parent=11 // pred_fallthru
        _
      // Predicated region
      $region37: #{spatial_self_attention.1} parent=11 // pred_check
        %p246 = pneg %p187
      $region38: #{spatial_self_attention.1} parent=11 // pred_check_branch
        %248 = sbr.rel (%p246) target = $region40
      $region39: #{spatial_self_attention.1} parent=11 // pred_region
        _
      $region40: #{spatial_self_attention.1} parent=11 // pred_fallthru
        _
    $region12: #{spatial_self_attention.1} parent=5 // pred_fallthru
      _
    %p249 = scmp.lt.s32.totalorder %s14, 2
    // Predicated region
    $region41: #{spatial_self_attention.1} parent=5 // pred_check
      %p250 = pneg %p249
    $region42: #{spatial_self_attention.1} parent=5 // pred_check_branch
      %252 = sbr.rel (%p250) target = $region44
    $region43: #{spatial_self_attention.1} parent=5 // pred_region
      // Predicated region
      $region45: #{spatial_self_attention.1} parent=43 // pred_check
        %p253 = pneg %p34
      $region46: #{spatial_self_attention.1} parent=43 // pred_check_branch
        %255 = sbr.rel (%p253) target = $region48
      $region47: #{spatial_self_attention.1} parent=43 // pred_region
        %p256 = scmp.lt.s32.totalorder %s14, 1
        %s257 = scalar_select %p256, %s14, 1
        %s258 = smul.addr %s257, 32
        %s259 = smul.addr %s258, 8
        %s260 = scalar_lea.vmem %s0, %s259
      $region48: #{spatial_self_attention.1} parent=43 // pred_fallthru
        _
    $region44: #{spatial_self_attention.1} parent=5 // pred_fallthru
      _
    %p261 = scmp.le.s32.totalorder 1, %s14
    %p262 = scmp.lt.s32.totalorder %s14, 3
    %p263 = pnand %p261, %p262
    %p264 = pneg %p263
    // Predicated region
    $region49: #{spatial_self_attention.1} parent=5 // pred_check
      _
    $region50: #{spatial_self_attention.1} parent=5 // pred_check_branch
      %266 = sbr.rel (%p263) target = $region52
    $region51: #{spatial_self_attention.1} parent=5 // pred_region
      %s267 = ssub.s32 %s14, 1
      %p268 = scmp.lt.s32.totalorder %s19, 1
      %s269 = scalar_select %p268, %s19, 1
      %s270 = smul.addr %s269, 32
      %s271 = smul.addr %s270, 8
      %s272 = scalar_lea.vmem %s0, %s271
      %p273 = pneg %p40
      %p274 = pneg %p37
      %p275 = pneg %p61
      %p276 = pneg %p58
      %p277 = pneg %p82
      %p278 = pneg %p79
      %p279 = pneg %p103
      %p280 = pneg %p100
      %p281 = pneg %p124
      %p282 = pneg %p121
      %p283 = pneg %p145
      %p284 = pneg %p142
      %p285 = pneg %p166
      %p286 = pneg %p163
      %p287 = pneg %p187
      %p288 = pneg %p184
      %p289 = pneg %p213
      %p290 = pneg %p210
      %p291 = scmp.lt.s32.totalorder %s19, 1
      %s292 = scalar_select %p291, %s19, 1
      %s293 = smul.addr %s292, 32
      %s294 = smul.addr %s293, 8
      %s295 = scalar_lea.vmem %s8, %s294
      %p296 = scmp.lt.s32.totalorder %s19, 1
      %s297 = scalar_select %p296, %s19, 1
      %s298 = smul.addr %s297, 32
      %s299 = smul.addr %s298, 8
      %s300 = scalar_lea.vmem %s0, %s299
      %p301 = scmp.lt.s32.totalorder %s19, 1
      %s302 = scalar_select %p301, %s19, 1
      %s303 = smul.addr %s302, 32
      %s304 = smul.addr %s303, 8
      %s305 = scalar_lea.vmem %s8, %s304
      %v307 = vld [vmem:[%s300] sm:$0xff]
      %v308 = vld [vmem:[%s300 + $0x8] sm:$0xff]
      %v309 = vld [vmem:[%s300 + $0x10] sm:$0xff]
      %v310 = vld [vmem:[%s300 + $0x18] sm:$0xff]
      %v311 = vld [vmem:[%s300 + $0x20] sm:$0xff]
      %v312 = vld [vmem:[%s300 + $0x28] sm:$0xff]
      %v313 = vld [vmem:[%s300 + $0x30] sm:$0xff]
      %v314 = vld [vmem:[%s300 + $0x38] sm:$0xff]
      %v315 = vld [vmem:[%s300 + $0x40] sm:$0xff]
      %v316 = vld [vmem:[%s300 + $0x48] sm:$0xff]
      %v317 = vld [vmem:[%s300 + $0x50] sm:$0xff]
      %v318 = vld [vmem:[%s300 + $0x58] sm:$0xff]
      %v319 = vld [vmem:[%s300 + $0x60] sm:$0xff]
      %v320 = vld [vmem:[%s300 + $0x68] sm:$0xff]
      %v321 = vld [vmem:[%s300 + $0x70] sm:$0xff]
      %v322 = vld [vmem:[%s300 + $0x78] sm:$0xff]
      %v323 = vld [vmem:[%s300 + $0x80] sm:$0xff]
      %v324 = vld [vmem:[%s300 + $0x88] sm:$0xff]
      %v325 = vld [vmem:[%s300 + $0x90] sm:$0xff]
      %v326 = vld [vmem:[%s300 + $0x98] sm:$0xff]
      %v327 = vld [vmem:[%s300 + $0xa0] sm:$0xff]
      %v328 = vld [vmem:[%s300 + $0xa8] sm:$0xff]
      %v329 = vld [vmem:[%s300 + $0xb0] sm:$0xff]
      %v330 = vld [vmem:[%s300 + $0xb8] sm:$0xff]
      %v331 = vld [vmem:[%s300 + $0xc0] sm:$0xff]
      %v332 = vld [vmem:[%s300 + $0xc8] sm:$0xff]
      %v333 = vld [vmem:[%s300 + $0xd0] sm:$0xff]
      %v334 = vld [vmem:[%s300 + $0xd8] sm:$0xff]
      %v335 = vld [vmem:[%s300 + $0xe0] sm:$0xff]
      %v336 = vld [vmem:[%s300 + $0xe8] sm:$0xff]
      %v337 = vld [vmem:[%s300 + $0xf0] sm:$0xff]
      %v338 = vld [vmem:[%s300 + $0xf8] sm:$0xff]
      %339 = vxpose.xlu0.b32.start [1/16] %v307, 128
      %340 = vxpose.xlu0.b32.cont [2/16] %v309, 128
      %341 = vxpose.xlu0.b32.cont [3/16] %v311, 128
      %342 = vxpose.xlu0.b32.cont [4/16] %v313, 128
      %343 = vxpose.xlu0.b32.cont [5/16] %v315, 128
      %344 = vxpose.xlu0.b32.cont [6/16] %v317, 128
      %345 = vxpose.xlu0.b32.cont [7/16] %v319, 128
      %346 = vxpose.xlu0.b32.cont [8/16] %v321, 128
      %347 = vxpose.xlu0.b32.cont [9/16] %v323, 128
      %348 = vxpose.xlu0.b32.cont [10/16] %v325, 128
      %349 = vxpose.xlu0.b32.cont [11/16] %v327, 128
      %350 = vxpose.xlu0.b32.cont [12/16] %v329, 128
      %351 = vxpose.xlu0.b32.cont [13/16] %v331, 128
      %352 = vxpose.xlu0.b32.cont [14/16] %v333, 128
      %353 = vxpose.xlu0.b32.cont [15/16] %v335, 128
      %354 = vxpose.xlu0.b32.end [16/16] %v337, 128
      %v355 = vpop.trf.xlu0
      %v356 = vpop.trf.xlu0
      %v357 = vpop.trf.xlu0
      %v358 = vpop.trf.xlu0
      %v359 = vpop.trf.xlu0
      %v360 = vpop.trf.xlu0
      %v361 = vpop.trf.xlu0
      %v362 = vpop.trf.xlu0
      %v363 = vpop.trf.xlu0
      %v364 = vpop.trf.xlu0
      %v365 = vpop.trf.xlu0
      %v366 = vpop.trf.xlu0
      %v367 = vpop.trf.xlu0
      %v368 = vpop.trf.xlu0
      %v369 = vpop.trf.xlu0
      %v370 = vpop.trf.xlu0
      %371 = vxpose.xlu0.b32.start [1/16] %v308, 128
      %372 = vxpose.xlu0.b32.cont [2/16] %v310, 128
      %373 = vxpose.xlu0.b32.cont [3/16] %v312, 128
      %374 = vxpose.xlu0.b32.cont [4/16] %v314, 128
      %375 = vxpose.xlu0.b32.cont [5/16] %v316, 128
      %376 = vxpose.xlu0.b32.cont [6/16] %v318, 128
      %377 = vxpose.xlu0.b32.cont [7/16] %v320, 128
      %378 = vxpose.xlu0.b32.cont [8/16] %v322, 128
      %379 = vxpose.xlu0.b32.cont [9/16] %v324, 128
      %380 = vxpose.xlu0.b32.cont [10/16] %v326, 128
      %381 = vxpose.xlu0.b32.cont [11/16] %v328, 128
      %382 = vxpose.xlu0.b32.cont [12/16] %v330, 128
      %383 = vxpose.xlu0.b32.cont [13/16] %v332, 128
      %384 = vxpose.xlu0.b32.cont [14/16] %v334, 128
      %385 = vxpose.xlu0.b32.cont [15/16] %v336, 128
      %386 = vxpose.xlu0.b32.end [16/16] %v338, 128
      %v387 = vpop.trf.xlu0
      %v388 = vpop.trf.xlu0
      %v389 = vpop.trf.xlu0
      %v390 = vpop.trf.xlu0
      %v391 = vpop.trf.xlu0
      %v392 = vpop.trf.xlu0
      %v393 = vpop.trf.xlu0
      %v394 = vpop.trf.xlu0
      %v395 = vpop.trf.xlu0
      %v396 = vpop.trf.xlu0
      %v397 = vpop.trf.xlu0
      %v398 = vpop.trf.xlu0
      %v399 = vpop.trf.xlu0
      %v400 = vpop.trf.xlu0
      %v401 = vpop.trf.xlu0
      %v402 = vpop.trf.xlu0
      %v403 = vadd.f32 %v355, %v356
      %v404 = vadd.f32 %v403, %v357
      %v405 = vadd.f32 %v404, %v358
      %v406 = vadd.f32 %v405, %v359
      %v407 = vadd.f32 %v406, %v360
      %v408 = vadd.f32 %v407, %v361
      %v409 = vadd.f32 %v408, %v362
      %v410 = vadd.f32 %v409, %v363
      %v411 = vadd.f32 %v410, %v364
      %v412 = vadd.f32 %v411, %v365
      %v413 = vadd.f32 %v412, %v366
      %v414 = vadd.f32 %v413, %v367
      %v415 = vadd.f32 %v414, %v368
      %v416 = vadd.f32 %v415, %v369
      %v417 = vadd.f32 %v416, %v370
      %v418 = vadd.f32 %v417, %v387
      %v419 = vadd.f32 %v418, %v388
      %v420 = vadd.f32 %v419, %v389
      %v421 = vadd.f32 %v420, %v390
      %v422 = vadd.f32 %v421, %v391
      %v423 = vadd.f32 %v422, %v392
      %v424 = vadd.f32 %v423, %v393
      %v425 = vadd.f32 %v424, %v394
      %v426 = vadd.f32 %v425, %v395
      %v427 = vadd.f32 %v426, %v396
      %v428 = vadd.f32 %v427, %v397
      %v429 = vadd.f32 %v428, %v398
      %v430 = vadd.f32 %v429, %v399
      %v431 = vadd.f32 %v430, %v400
      %v432 = vadd.f32 %v431, %v401
      %v433 = vadd.f32 %v432, %v402
      %v434 = vrot.slane %v433, 4
      %v435 = vadd.f32 %v433, %v434
      %v436 = vrot.slane %v435, 2
      %v437 = vadd.f32 %v435, %v436
      %v438 = vrot.slane %v437, 1
      %v439 = vadd.f32 %v437, %v438
      %v440 = vmul.f32 %v355, %v355
      %v441 = vmul.f32 %v356, %v356
      %v442 = vmul.f32 %v357, %v357
      %v443 = vmul.f32 %v358, %v358
      %v444 = vmul.f32 %v359, %v359
      %v445 = vmul.f32 %v360, %v360
      %v446 = vmul.f32 %v361, %v361
      %v447 = vmul.f32 %v362, %v362
      %v448 = vmul.f32 %v363, %v363
      %v449 = vmul.f32 %v364, %v364
      %v450 = vmul.f32 %v365, %v365
      %v451 = vmul.f32 %v366, %v366
      %v452 = vmul.f32 %v367, %v367
      %v453 = vmul.f32 %v368, %v368
      %v454 = vmul.f32 %v369, %v369
      %v455 = vmul.f32 %v370, %v370
      %v456 = vmul.f32 %v387, %v387
      %v457 = vmul.f32 %v388, %v388
      %v458 = vmul.f32 %v389, %v389
      %v459 = vmul.f32 %v390, %v390
      %v460 = vmul.f32 %v391, %v391
      %v461 = vmul.f32 %v392, %v392
      %v462 = vmul.f32 %v393, %v393
      %v463 = vmul.f32 %v394, %v394
      %v464 = vmul.f32 %v395, %v395
      %v465 = vmul.f32 %v396, %v396
      %v466 = vmul.f32 %v397, %v397
      %v467 = vmul.f32 %v398, %v398
      %v468 = vmul.f32 %v399, %v399
      %v469 = vmul.f32 %v400, %v400
      %v470 = vmul.f32 %v401, %v401
      %v471 = vmul.f32 %v402, %v402
      %v472 = vadd.f32 %v440, %v441
      %v473 = vadd.f32 %v472, %v442
      %v474 = vadd.f32 %v473, %v443
      %v475 = vadd.f32 %v474, %v444
      %v476 = vadd.f32 %v475, %v445
      %v477 = vadd.f32 %v476, %v446
      %v478 = vadd.f32 %v477, %v447
      %v479 = vadd.f32 %v478, %v448
      %v480 = vadd.f32 %v479, %v449
      %v481 = vadd.f32 %v480, %v450
      %v482 = vadd.f32 %v481, %v451
      %v483 = vadd.f32 %v482, %v452
      %v484 = vadd.f32 %v483, %v453
      %v485 = vadd.f32 %v484, %v454
      %v486 = vadd.f32 %v485, %v455
      %v487 = vadd.f32 %v486, %v456
      %v488 = vadd.f32 %v487, %v457
      %v489 = vadd.f32 %v488, %v458
      %v490 = vadd.f32 %v489, %v459
      %v491 = vadd.f32 %v490, %v460
      %v492 = vadd.f32 %v491, %v461
      %v493 = vadd.f32 %v492, %v462
      %v494 = vadd.f32 %v493, %v463
      %v495 = vadd.f32 %v494, %v464
      %v496 = vadd.f32 %v495, %v465
      %v497 = vadd.f32 %v496, %v466
      %v498 = vadd.f32 %v497, %v467
      %v499 = vadd.f32 %v498, %v468
      %v500 = vadd.f32 %v499, %v469
      %v501 = vadd.f32 %v500, %v470
      %v502 = vadd.f32 %v501, %v471
      %v503 = vrot.slane %v502, 4
      %v504 = vadd.f32 %v502, %v503
      %v505 = vrot.slane %v504, 2
      %v506 = vadd.f32 %v504, %v505
      %v507 = vrot.slane %v506, 1
      %v508 = vadd.f32 %v506, %v507
      %v509 = vld [vmem:[%s1] sm:$0xff]
      %v510 = vld [vmem:[%s1 + $0x8] sm:$0xff]
      %v511 = vld [vmem:[%s1 + $0x10] sm:$0xff]
      %v512 = vld [vmem:[%s1 + $0x18] sm:$0xff]
      %v513 = vld [vmem:[%s1 + $0x20] sm:$0xff]
      %v514 = vld [vmem:[%s1 + $0x28] sm:$0xff]
      %v515 = vld [vmem:[%s1 + $0x30] sm:$0xff]
      %v516 = vld [vmem:[%s1 + $0x38] sm:$0xff]
      %v517 = vld [vmem:[%s1 + $0x40] sm:$0xff]
      %v518 = vld [vmem:[%s1 + $0x48] sm:$0xff]
      %v519 = vld [vmem:[%s1 + $0x50] sm:$0xff]
      %v520 = vld [vmem:[%s1 + $0x58] sm:$0xff]
      %v521 = vld [vmem:[%s1 + $0x60] sm:$0xff]
      %v522 = vld [vmem:[%s1 + $0x68] sm:$0xff]
      %v523 = vld [vmem:[%s1 + $0x70] sm:$0xff]
      %v524 = vld [vmem:[%s1 + $0x78] sm:$0xff]
      %525 = vmatprep.subr.mxu0 0.0
      %526 = vmatpush1.msra.mxu0 %v524
      %527 = vmatprep.subr.mxu0 0.0
      %528 = vmatpush1.msra.mxu0 %v523
      %529 = vmatprep.subr.mxu0 0.0
      %530 = vmatpush1.msra.mxu0 %v522
      %531 = vmatprep.subr.mxu0 0.0
      %532 = vmatpush1.msra.mxu0 %v521
      %533 = vmatprep.subr.mxu0 0.0
      %534 = vmatpush1.msra.mxu0 %v520
      %535 = vmatprep.subr.mxu0 0.0
      %536 = vmatpush1.msra.mxu0 %v519
      %537 = vmatprep.subr.mxu0 0.0
      %538 = vmatpush1.msra.mxu0 %v518
      %539 = vmatprep.subr.mxu0 0.0
      %540 = vmatpush1.msra.mxu0 %v517
      %541 = vmatprep.subr.mxu0 0.0
      %542 = vmatpush1.msra.mxu0 %v516
      %543 = vmatprep.subr.mxu0 0.0
      %544 = vmatpush1.msra.mxu0 %v515
      %545 = vmatprep.subr.mxu0 0.0
      %546 = vmatpush1.msra.mxu0 %v514
      %547 = vmatprep.subr.mxu0 0.0
      %548 = vmatpush1.msra.mxu0 %v513
      %549 = vmatprep.subr.mxu0 0.0
      %550 = vmatpush1.msra.mxu0 %v512
      %551 = vmatprep.subr.mxu0 0.0
      %552 = vmatpush1.msra.mxu0 %v511
      %553 = vmatprep.subr.mxu0 0.0
      %554 = vmatpush1.msra.mxu0 %v510
      %555 = vmatprep.subr.mxu0 0.0
      %556 = vmatpush1.msra.mxu0 %v509
      %557 = vmatprep.subr.mxu0 0.0
      %558 = vmatpush2.msra.mxu0 0.0
      %559 = vmatprep.subr.mxu0 0.0
      %560 = vmatpush2.msra.mxu0 0.0
      %561 = vmatprep.subr.mxu0 0.0
      %562 = vmatpush2.msra.mxu0 0.0
      %563 = vmatprep.subr.mxu0 0.0
      %564 = vmatpush2.msra.mxu0 0.0
      %565 = vmatprep.subr.mxu0 0.0
      %566 = vmatpush2.msra.mxu0 0.0
      %567 = vmatprep.subr.mxu0 0.0
      %568 = vmatpush2.msra.mxu0 0.0
      %569 = vmatprep.subr.mxu0 0.0
      %570 = vmatpush2.msra.mxu0 0.0
      %571 = vmatprep.subr.mxu0 0.0
      %572 = vmatpush2.msra.mxu0 0.0
      %573 = vmatprep.subr.mxu0 0.0
      %574 = vmatpush2.msra.mxu0 0.0
      %575 = vmatprep.subr.mxu0 0.0
      %576 = vmatpush2.msra.mxu0 0.0
      %577 = vmatprep.subr.mxu0 0.0
      %578 = vmatpush2.msra.mxu0 0.0
      %579 = vmatprep.subr.mxu0 0.0
      %580 = vmatpush2.msra.mxu0 0.0
      %581 = vmatprep.subr.mxu0 0.0
      %582 = vmatpush2.msra.mxu0 0.0
      %583 = vmatprep.subr.mxu0 0.0
      %584 = vmatpush2.msra.mxu0 0.0
      %585 = vmatprep.subr.mxu0 0.0
      %586 = vmatpush2.msra.mxu0 0.0
      %587 = vmatprep.subr.mxu0 0.0
      %588 = vmatpush2.msra.mxu0 0.0
      %589 = vmatprep.mubr.f32.mxu0 0.0
      %590 = vmatmul.mubr.f32.gmra.mxu0 %v439
      %v591 = vpop.f32.mrf.mxu0
      %v592 = vadd.f32 0.0, %v591
      %v593 = vpop.f32.mrf.mxu0
      %594 = vdwg.mxu0
      %595 = vmatprep.subr.mxu0 0.0
      %596 = vmatpush1.msra.mxu0 %v524
      %597 = vmatprep.subr.mxu0 0.0
      %598 = vmatpush1.msra.mxu0 %v523
      %599 = vmatprep.subr.mxu0 0.0
      %600 = vmatpush1.msra.mxu0 %v522
      %601 = vmatprep.subr.mxu0 0.0
      %602 = vmatpush1.msra.mxu0 %v521
      %603 = vmatprep.subr.mxu0 0.0
      %604 = vmatpush1.msra.mxu0 %v520
      %605 = vmatprep.subr.mxu0 0.0
      %606 = vmatpush1.msra.mxu0 %v519
      %607 = vmatprep.subr.mxu0 0.0
      %608 = vmatpush1.msra.mxu0 %v518
      %609 = vmatprep.subr.mxu0 0.0
      %610 = vmatpush1.msra.mxu0 %v517
      %611 = vmatprep.subr.mxu0 0.0
      %612 = vmatpush1.msra.mxu0 %v516
      %613 = vmatprep.subr.mxu0 0.0
      %614 = vmatpush1.msra.mxu0 %v515
      %615 = vmatprep.subr.mxu0 0.0
      %616 = vmatpush1.msra.mxu0 %v514
      %617 = vmatprep.subr.mxu0 0.0
      %618 = vmatpush1.msra.mxu0 %v513
      %619 = vmatprep.subr.mxu0 0.0
      %620 = vmatpush1.msra.mxu0 %v512
      %621 = vmatprep.subr.mxu0 0.0
      %622 = vmatpush1.msra.mxu0 %v511
      %623 = vmatprep.subr.mxu0 0.0
      %624 = vmatpush1.msra.mxu0 %v510
      %625 = vmatprep.subr.mxu0 0.0
      %626 = vmatpush1.msra.mxu0 %v509
      %627 = vmatprep.subr.mxu0 0.0
      %628 = vmatpush2.msra.mxu0 0.0
      %629 = vmatprep.subr.mxu0 0.0
      %630 = vmatpush2.msra.mxu0 0.0
      %631 = vmatprep.subr.mxu0 0.0
      %632 = vmatpush2.msra.mxu0 0.0
      %633 = vmatprep.subr.mxu0 0.0
      %634 = vmatpush2.msra.mxu0 0.0
      %635 = vmatprep.subr.mxu0 0.0
      %636 = vmatpush2.msra.mxu0 0.0
      %637 = vmatprep.subr.mxu0 0.0
      %638 = vmatpush2.msra.mxu0 0.0
      %639 = vmatprep.subr.mxu0 0.0
      %640 = vmatpush2.msra.mxu0 0.0
      %641 = vmatprep.subr.mxu0 0.0
      %642 = vmatpush2.msra.mxu0 0.0
      %643 = vmatprep.subr.mxu0 0.0
      %644 = vmatpush2.msra.mxu0 0.0
      %645 = vmatprep.subr.mxu0 0.0
      %646 = vmatpush2.msra.mxu0 0.0
      %647 = vmatprep.subr.mxu0 0.0
      %648 = vmatpush2.msra.mxu0 0.0
      %649 = vmatprep.subr.mxu0 0.0
      %650 = vmatpush2.msra.mxu0 0.0
      %651 = vmatprep.subr.mxu0 0.0
      %652 = vmatpush2.msra.mxu0 0.0
      %653 = vmatprep.subr.mxu0 0.0
      %654 = vmatpush2.msra.mxu0 0.0
      %655 = vmatprep.subr.mxu0 0.0
      %656 = vmatpush2.msra.mxu0 0.0
      %657 = vmatprep.subr.mxu0 0.0
      %658 = vmatpush2.msra.mxu0 0.0
      %659 = vmatprep.mubr.f32.mxu0 0.0
      %660 = vmatmul.mubr.f32.gmra.mxu0 %v508
      %v661 = vpop.f32.mrf.mxu0
      %v662 = vadd.f32 0.0, %v661
      %v663 = vpop.f32.mrf.mxu0
      %664 = vdwg.mxu0
      %v665 = vmul.f32 %v592, %v592
      %v666 = vsub.f32 %v662, %v665
      %v667 = vadd.f32 %v666, 1e-06
      %v668 = vrsqrt.pop %v667
      %v669 = vld [vmem:[%s2] sm:$0x1]
      %v670 = vmul.f32 %v668, %v669
      %v671 = vld [vmem:[%s3] sm:$0x1]
      %v672 = vmul.f32 %v592, %v670
      %v673 = vsub.f32 %v671, %v672
      %v674 = vlaneseq
      %v675 = vshrl.u32 %v674, 7
      %v676 = vsub.s32 0, %v675
      %v677 = vrot.slane %v670, %v676
      %v678 = vmul.f32 %v355, %v677
      %v679 = vmul.f32 %v356, %v677
      %v680 = vmul.f32 %v357, %v677
      %v681 = vmul.f32 %v358, %v677
      %v682 = vmul.f32 %v359, %v677
      %v683 = vmul.f32 %v360, %v677
      %v684 = vmul.f32 %v361, %v677
      %v685 = vmul.f32 %v362, %v677
      %v686 = vmul.f32 %v363, %v677
      %v687 = vmul.f32 %v364, %v677
      %v688 = vmul.f32 %v365, %v677
      %v689 = vmul.f32 %v366, %v677
      %v690 = vmul.f32 %v367, %v677
      %v691 = vmul.f32 %v368, %v677
      %v692 = vmul.f32 %v369, %v677
      %v693 = vmul.f32 %v370, %v677
      %v694 = vmul.f32 %v387, %v677
      %v695 = vmul.f32 %v388, %v677
      %v696 = vmul.f32 %v389, %v677
      %v697 = vmul.f32 %v390, %v677
      %v698 = vmul.f32 %v391, %v677
      %v699 = vmul.f32 %v392, %v677
      %v700 = vmul.f32 %v393, %v677
      %v701 = vmul.f32 %v394, %v677
      %v702 = vmul.f32 %v395, %v677
      %v703 = vmul.f32 %v396, %v677
      %v704 = vmul.f32 %v397, %v677
      %v705 = vmul.f32 %v398, %v677
      %v706 = vmul.f32 %v399, %v677
      %v707 = vmul.f32 %v400, %v677
      %v708 = vmul.f32 %v401, %v677
      %v709 = vmul.f32 %v402, %v677
      %v711 = vlaneseq
      %v712 = vshrl.u32 %v711, 7
      %v713 = vsub.s32 0, %v712
      %v714 = vrot.slane %v673, %v713
      %v716 = vadd.f32 %v678, %v714
      %v717 = vadd.f32 %v679, %v714
      %v718 = vadd.f32 %v680, %v714
      %v719 = vadd.f32 %v681, %v714
      %v720 = vadd.f32 %v682, %v714
      %v721 = vadd.f32 %v683, %v714
      %v722 = vadd.f32 %v684, %v714
      %v723 = vadd.f32 %v685, %v714
      %v724 = vadd.f32 %v686, %v714
      %v725 = vadd.f32 %v687, %v714
      %v726 = vadd.f32 %v688, %v714
      %v727 = vadd.f32 %v689, %v714
      %v728 = vadd.f32 %v690, %v714
      %v729 = vadd.f32 %v691, %v714
      %v730 = vadd.f32 %v692, %v714
      %v731 = vadd.f32 %v693, %v714
      %v732 = vadd.f32 %v694, %v714
      %v733 = vadd.f32 %v695, %v714
      %v734 = vadd.f32 %v696, %v714
      %v735 = vadd.f32 %v697, %v714
      %v736 = vadd.f32 %v698, %v714
      %v737 = vadd.f32 %v699, %v714
      %v738 = vadd.f32 %v700, %v714
      %v739 = vadd.f32 %v701, %v714
      %v740 = vadd.f32 %v702, %v714
      %v741 = vadd.f32 %v703, %v714
      %v742 = vadd.f32 %v704, %v714
      %v743 = vadd.f32 %v705, %v714
      %v744 = vadd.f32 %v706, %v714
      %v745 = vadd.f32 %v707, %v714
      %v746 = vadd.f32 %v708, %v714
      %v747 = vadd.f32 %v709, %v714
      %v748 = vpack.c.bf16 %v717, %v716
      %v749 = vpack.c.bf16 %v719, %v718
      %v750 = vpack.c.bf16 %v721, %v720
      %v751 = vpack.c.bf16 %v723, %v722
      %v752 = vpack.c.bf16 %v725, %v724
      %v753 = vpack.c.bf16 %v727, %v726
      %v754 = vpack.c.bf16 %v729, %v728
      %v755 = vpack.c.bf16 %v731, %v730
      %v756 = vpack.c.bf16 %v733, %v732
      %v757 = vpack.c.bf16 %v735, %v734
      %v758 = vpack.c.bf16 %v737, %v736
      %v759 = vpack.c.bf16 %v739, %v738
      %v760 = vpack.c.bf16 %v741, %v740
      %v761 = vpack.c.bf16 %v743, %v742
      %v762 = vpack.c.bf16 %v745, %v744
      %v763 = vpack.c.bf16 %v747, %v746
      %v764 = vld [vmem:[%s4] sm:$0xff]
      %v765 = vld [vmem:[%s4 + $0x8] sm:$0xf]
      %v766 = vld [vmem:[%s4 + $0xc] sm:$0xff]
      %v767 = vld [vmem:[%s4 + $0x14] sm:$0xf]
      %v768 = vld [vmem:[%s4 + $0x18] sm:$0xff]
      %v769 = vld [vmem:[%s4 + $0x20] sm:$0xf]
      %v770 = vld [vmem:[%s4 + $0x24] sm:$0xff]
      %v771 = vld [vmem:[%s4 + $0x2c] sm:$0xf]
      %v772 = vld [vmem:[%s4 + $0x30] sm:$0xff]
      %v773 = vld [vmem:[%s4 + $0x38] sm:$0xf]
      %v774 = vld [vmem:[%s4 + $0x3c] sm:$0xff]
      %v775 = vld [vmem:[%s4 + $0x44] sm:$0xf]
      %v776 = vld [vmem:[%s4 + $0x48] sm:$0xff]
      %v777 = vld [vmem:[%s4 + $0x50] sm:$0xf]
      %v778 = vld [vmem:[%s4 + $0x54] sm:$0xff]
      %v779 = vld [vmem:[%s4 + $0x5c] sm:$0xf]
      %v780 = vld [vmem:[%s4 + $0x60] sm:$0xff]
      %v781 = vld [vmem:[%s4 + $0x68] sm:$0xf]
      %v782 = vld [vmem:[%s4 + $0x6c] sm:$0xff]
      %v783 = vld [vmem:[%s4 + $0x74] sm:$0xf]
      %v784 = vld [vmem:[%s4 + $0x78] sm:$0xff]
      %v785 = vld [vmem:[%s4 + $0x80] sm:$0xf]
      %v786 = vld [vmem:[%s4 + $0x84] sm:$0xff]
      %v787 = vld [vmem:[%s4 + $0x8c] sm:$0xf]
      %v788 = vld [vmem:[%s4 + $0x90] sm:$0xff]
      %v789 = vld [vmem:[%s4 + $0x98] sm:$0xf]
      %v790 = vld [vmem:[%s4 + $0x9c] sm:$0xff]
      %v791 = vld [vmem:[%s4 + $0xa4] sm:$0xf]
      %v792 = vld [vmem:[%s4 + $0xa8] sm:$0xff]
      %v793 = vld [vmem:[%s4 + $0xb0] sm:$0xf]
      %v794 = vld [vmem:[%s4 + $0xb4] sm:$0xff]
      %v795 = vld [vmem:[%s4 + $0xbc] sm:$0xf]
      %v796 = vld [vmem:[%s5] sm:$0x7]
      %v798 = vlaneseq
      %v799 = vshrl.u32 %v798, 7
      %v800 = vsub.s32 0, %v799
      %v801 = vrot.slane %v796, %v800
      %v802 = vlaneseq
      %v803 = vshrl.u32 %v802, 7
      %v804 = vsub.s32 1, %v803
      %v805 = vrot.slane %v796, %v804
      %v806 = vlaneseq
      %v807 = vshrl.u32 %v806, 7
      %v808 = vsub.s32 2, %v807
      %v809 = vrot.slane %v796, %v808
      %v845 = vunpack.c.l.b16 %v764
      %v846 = vunpack.c.h.b16 %v764
      %v847 = vunpack.c.l.b16 %v765
      %v848 = vunpack.c.l.b16 %v766
      %v849 = vunpack.c.h.b16 %v766
      %v850 = vunpack.c.l.b16 %v767
      %v851 = vunpack.c.l.b16 %v768
      %v852 = vunpack.c.h.b16 %v768
      %v853 = vunpack.c.l.b16 %v769
      %v854 = vunpack.c.l.b16 %v770
      %v855 = vunpack.c.h.b16 %v770
      %v856 = vunpack.c.l.b16 %v771
      %v857 = vunpack.c.l.b16 %v772
      %v858 = vunpack.c.h.b16 %v772
      %v859 = vunpack.c.l.b16 %v773
      %v860 = vunpack.c.l.b16 %v774
      %v861 = vunpack.c.h.b16 %v774
      %v862 = vunpack.c.l.b16 %v775
      %v863 = vunpack.c.l.b16 %v776
      %v864 = vunpack.c.h.b16 %v776
      %v865 = vunpack.c.l.b16 %v777
      %v866 = vunpack.c.l.b16 %v778
      %v867 = vunpack.c.h.b16 %v778
      %v868 = vunpack.c.l.b16 %v779
      %v869 = vunpack.c.l.b16 %v780
      %v870 = vunpack.c.h.b16 %v780
      %v871 = vunpack.c.l.b16 %v781
      %v872 = vunpack.c.l.b16 %v782
      %v873 = vunpack.c.h.b16 %v782
      %v874 = vunpack.c.l.b16 %v783
      %v875 = vunpack.c.l.b16 %v784
      %v876 = vunpack.c.h.b16 %v784
      %v877 = vunpack.c.l.b16 %v785
      %v878 = vunpack.c.l.b16 %v786
      %v879 = vunpack.c.h.b16 %v786
      %v880 = vunpack.c.l.b16 %v787
      %v881 = vunpack.c.l.b16 %v788
      %v882 = vunpack.c.h.b16 %v788
      %v883 = vunpack.c.l.b16 %v789
      %v884 = vunpack.c.l.b16 %v790
      %v885 = vunpack.c.h.b16 %v790
      %v886 = vunpack.c.l.b16 %v791
      %v887 = vunpack.c.l.b16 %v792
      %v888 = vunpack.c.h.b16 %v792
      %v889 = vunpack.c.l.b16 %v793
      %v890 = vunpack.c.l.b16 %v794
      %v891 = vunpack.c.h.b16 %v794
      %v892 = vunpack.c.l.b16 %v795
      %v893 = vpack.c.b16 %v848, %v845
      %v894 = vpack.c.b16 %v849, %v846
      %v895 = vpack.c.b16 %v850, %v847
      %v896 = vpack.c.b16 %v854, %v851
      %v897 = vpack.c.b16 %v855, %v852
      %v898 = vpack.c.b16 %v856, %v853
      %v899 = vpack.c.b16 %v860, %v857
      %v900 = vpack.c.b16 %v861, %v858
      %v901 = vpack.c.b16 %v862, %v859
      %v902 = vpack.c.b16 %v866, %v863
      %v903 = vpack.c.b16 %v867, %v864
      %v904 = vpack.c.b16 %v868, %v865
      %v905 = vpack.c.b16 %v872, %v869
      %v906 = vpack.c.b16 %v873, %v870
      %v907 = vpack.c.b16 %v874, %v871
      %v908 = vpack.c.b16 %v878, %v875
      %v909 = vpack.c.b16 %v879, %v876
      %v910 = vpack.c.b16 %v880, %v877
      %v911 = vpack.c.b16 %v884, %v881
      %v912 = vpack.c.b16 %v885, %v882
      %v913 = vpack.c.b16 %v886, %v883
      %v914 = vpack.c.b16 %v890, %v887
      %v915 = vpack.c.b16 %v891, %v888
      %v916 = vpack.c.b16 %v892, %v889
      %941 = vmatprep.subr.bf16.mxu0 %v915
      %942 = vmatpush1.bf16.msra.mxu0 %v914
      %943 = vmatprep.subr.bf16.mxu0 %v912
      %944 = vmatpush1.bf16.msra.mxu0 %v911
      %945 = vmatprep.subr.bf16.mxu0 %v909
      %946 = vmatpush1.bf16.msra.mxu0 %v908
      %947 = vmatprep.subr.bf16.mxu0 %v906
      %948 = vmatpush1.bf16.msra.mxu0 %v905
      %949 = vmatprep.subr.bf16.mxu0 %v903
      %950 = vmatpush1.bf16.msra.mxu0 %v902
      %951 = vmatprep.subr.bf16.mxu0 %v900
      %952 = vmatpush1.bf16.msra.mxu0 %v899
      %953 = vmatprep.subr.bf16.mxu0 %v897
      %954 = vmatpush1.bf16.msra.mxu0 %v896
      %955 = vmatprep.subr.bf16.mxu0 %v894
      %956 = vmatpush1.bf16.msra.mxu0 %v893
      %957 = vmatprep.subr.bf16.mxu0 0
      %958 = vmatpush2.bf16.msra.mxu0 0
      %959 = vmatprep.subr.bf16.mxu0 0
      %960 = vmatpush2.bf16.msra.mxu0 0
      %961 = vmatprep.subr.bf16.mxu0 0
      %962 = vmatpush2.bf16.msra.mxu0 0
      %963 = vmatprep.subr.bf16.mxu0 0
      %964 = vmatpush2.bf16.msra.mxu0 0
      %965 = vmatprep.subr.bf16.mxu0 0
      %966 = vmatpush2.bf16.msra.mxu0 0
      %967 = vmatprep.subr.bf16.mxu0 0
      %968 = vmatpush2.bf16.msra.mxu0 0
      %969 = vmatprep.subr.bf16.mxu0 0
      %970 = vmatpush2.bf16.msra.mxu0 0
      %971 = vmatprep.subr.bf16.mxu0 0
      %972 = vmatpush2.bf16.msra.mxu0 0
      %973 = vmatprep.mubr.bf16.mxu0 0
      %974 = vmatmul.mubr.bf16.gmra.mxu0 %v748
      %v975 = vpop.f32.mrf.mxu0
      %v976 = vadd.f32 %v801, %v975
      %v977 = vpop.f32.mrf.mxu0
      %v978 = vadd.f32 %v805, %v977
      %v979 = vpop.f32.mrf.mxu0
      %v980 = vadd.f32 %v801, %v979
      %v981 = vpop.f32.mrf.mxu0
      %v982 = vadd.f32 %v805, %v981
      %983 = vmatprep.mubr.bf16.mxu0 0
      %984 = vmatmul.mubr.bf16.gmra.mxu0 %v749
      %v985 = vpop.f32.mrf.mxu0
      %v986 = vadd.f32 %v801, %v985
      %v987 = vpop.f32.mrf.mxu0
      %v988 = vadd.f32 %v805, %v987
      %v989 = vpop.f32.mrf.mxu0
      %v990 = vadd.f32 %v801, %v989
      %v991 = vpop.f32.mrf.mxu0
      %v992 = vadd.f32 %v805, %v991
      %993 = vmatprep.mubr.bf16.mxu0 0
      %994 = vmatmul.mubr.bf16.gmra.mxu0 %v750
      %v995 = vpop.f32.mrf.mxu0
      %v996 = vadd.f32 %v801, %v995
      %v997 = vpop.f32.mrf.mxu0
      %v998 = vadd.f32 %v805, %v997
      %v999 = vpop.f32.mrf.mxu0
      %v1000 = vadd.f32 %v801, %v999
      %v1001 = vpop.f32.mrf.mxu0
      %v1002 = vadd.f32 %v805, %v1001
      %1003 = vmatprep.mubr.bf16.mxu0 0
      %1004 = vmatmul.mubr.bf16.gmra.mxu0 %v751
      %v1005 = vpop.f32.mrf.mxu0
      %v1006 = vadd.f32 %v801, %v1005
      %v1007 = vpop.f32.mrf.mxu0
      %v1008 = vadd.f32 %v805, %v1007
      %v1009 = vpop.f32.mrf.mxu0
      %v1010 = vadd.f32 %v801, %v1009
      %v1011 = vpop.f32.mrf.mxu0
      %v1012 = vadd.f32 %v805, %v1011
      %1013 = vmatprep.mubr.bf16.mxu0 0
      %1014 = vmatmul.mubr.bf16.gmra.mxu0 %v752
      %v1015 = vpop.f32.mrf.mxu0
      %v1016 = vadd.f32 %v801, %v1015
      %v1017 = vpop.f32.mrf.mxu0
      %v1018 = vadd.f32 %v805, %v1017
      %v1019 = vpop.f32.mrf.mxu0
      %v1020 = vadd.f32 %v801, %v1019
      %v1021 = vpop.f32.mrf.mxu0
      %v1022 = vadd.f32 %v805, %v1021
      %1023 = vmatprep.mubr.bf16.mxu0 0
      %1024 = vmatmul.mubr.bf16.gmra.mxu0 %v753
      %v1025 = vpop.f32.mrf.mxu0
      %v1026 = vadd.f32 %v801, %v1025
      %v1027 = vpop.f32.mrf.mxu0
      %v1028 = vadd.f32 %v805, %v1027
      %v1029 = vpop.f32.mrf.mxu0
      %v1030 = vadd.f32 %v801, %v1029
      %v1031 = vpop.f32.mrf.mxu0
      %v1032 = vadd.f32 %v805, %v1031
      %1033 = vmatprep.mubr.bf16.mxu0 0
      %1034 = vmatmul.mubr.bf16.gmra.mxu0 %v754
      %v1035 = vpop.f32.mrf.mxu0
      %v1036 = vadd.f32 %v801, %v1035
      %v1037 = vpop.f32.mrf.mxu0
      %v1038 = vadd.f32 %v805, %v1037
      %v1039 = vpop.f32.mrf.mxu0
      %v1040 = vadd.f32 %v801, %v1039
      %v1041 = vpop.f32.mrf.mxu0
      %v1042 = vadd.f32 %v805, %v1041
      %1043 = vmatprep.mubr.bf16.mxu0 0
      %1044 = vmatmul.mubr.bf16.gmra.mxu0 %v755
      %v1045 = vpop.f32.mrf.mxu0
      %v1046 = vadd.f32 %v801, %v1045
      %v1047 = vpop.f32.mrf.mxu0
      %v1048 = vadd.f32 %v805, %v1047
      %v1049 = vpop.f32.mrf.mxu0
      %v1050 = vadd.f32 %v801, %v1049
      %v1051 = vpop.f32.mrf.mxu0
      %v1052 = vadd.f32 %v805, %v1051
      %1053 = vmatprep.mubr.bf16.mxu0 0
      %1054 = vmatmul.mubr.bf16.gmra.mxu0 %v756
      %v1055 = vpop.f32.mrf.mxu0
      %v1056 = vadd.f32 %v801, %v1055
      %v1057 = vpop.f32.mrf.mxu0
      %v1058 = vadd.f32 %v805, %v1057
      %v1059 = vpop.f32.mrf.mxu0
      %v1060 = vadd.f32 %v801, %v1059
      %v1061 = vpop.f32.mrf.mxu0
      %v1062 = vadd.f32 %v805, %v1061
      %1063 = vmatprep.mubr.bf16.mxu0 0
      %1064 = vmatmul.mubr.bf16.gmra.mxu0 %v757
      %v1065 = vpop.f32.mrf.mxu0
      %v1066 = vadd.f32 %v801, %v1065
      %v1067 = vpop.f32.mrf.mxu0
      %v1068 = vadd.f32 %v805, %v1067
      %v1069 = vpop.f32.mrf.mxu0
      %v1070 = vadd.f32 %v801, %v1069
      %v1071 = vpop.f32.mrf.mxu0
      %v1072 = vadd.f32 %v805, %v1071
      %1073 = vmatprep.mubr.bf16.mxu0 0
      %1074 = vmatmul.mubr.bf16.gmra.mxu0 %v758
      %v1075 = vpop.f32.mrf.mxu0
      %v1076 = vadd.f32 %v801, %v1075
      %v1077 = vpop.f32.mrf.mxu0
      %v1078 = vadd.f32 %v805, %v1077
      %v1079 = vpop.f32.mrf.mxu0
      %v1080 = vadd.f32 %v801, %v1079
      %v1081 = vpop.f32.mrf.mxu0
      %v1082 = vadd.f32 %v805, %v1081
      %1083 = vmatprep.mubr.bf16.mxu0 0
      %1084 = vmatmul.mubr.bf16.gmra.mxu0 %v759
      %v1085 = vpop.f32.mrf.mxu0
      %v1086 = vadd.f32 %v801, %v1085
      %v1087 = vpop.f32.mrf.mxu0
      %v1088 = vadd.f32 %v805, %v1087
      %v1089 = vpop.f32.mrf.mxu0
      %v1090 = vadd.f32 %v801, %v1089
      %v1091 = vpop.f32.mrf.mxu0
      %v1092 = vadd.f32 %v805, %v1091
      %1093 = vmatprep.mubr.bf16.mxu0 0
      %1094 = vmatmul.mubr.bf16.gmra.mxu0 %v760
      %v1095 = vpop.f32.mrf.mxu0
      %v1096 = vadd.f32 %v801, %v1095
      %v1097 = vpop.f32.mrf.mxu0
      %v1098 = vadd.f32 %v805, %v1097
      %v1099 = vpop.f32.mrf.mxu0
      %v1100 = vadd.f32 %v801, %v1099
      %v1101 = vpop.f32.mrf.mxu0
      %v1102 = vadd.f32 %v805, %v1101
      %1103 = vmatprep.mubr.bf16.mxu0 0
      %1104 = vmatmul.mubr.bf16.gmra.mxu0 %v761
      %v1105 = vpop.f32.mrf.mxu0
      %v1106 = vadd.f32 %v801, %v1105
      %v1107 = vpop.f32.mrf.mxu0
      %v1108 = vadd.f32 %v805, %v1107
      %v1109 = vpop.f32.mrf.mxu0
      %v1110 = vadd.f32 %v801, %v1109
      %v1111 = vpop.f32.mrf.mxu0
      %v1112 = vadd.f32 %v805, %v1111
      %1113 = vmatprep.mubr.bf16.mxu0 0
      %1114 = vmatmul.mubr.bf16.gmra.mxu0 %v762
      %v1115 = vpop.f32.mrf.mxu0
      %v1116 = vadd.f32 %v801, %v1115
      %v1117 = vpop.f32.mrf.mxu0
      %v1118 = vadd.f32 %v805, %v1117
      %v1119 = vpop.f32.mrf.mxu0
      %v1120 = vadd.f32 %v801, %v1119
      %v1121 = vpop.f32.mrf.mxu0
      %v1122 = vadd.f32 %v805, %v1121
      %1123 = vmatprep.mubr.bf16.mxu0 0
      %1124 = vmatmul.mubr.bf16.gmra.mxu0 %v763
      %v1125 = vpop.f32.mrf.mxu0
      %v1126 = vadd.f32 %v801, %v1125
      %v1127 = vpop.f32.mrf.mxu0
      %v1128 = vadd.f32 %v805, %v1127
      %v1129 = vpop.f32.mrf.mxu0
      %v1130 = vadd.f32 %v801, %v1129
      %v1131 = vpop.f32.mrf.mxu0
      %v1132 = vadd.f32 %v805, %v1131
      %1133 = vdwg.mxu0
      %1134 = vmatprep.subr.bf16.mxu0 0
      %1135 = vmatpush1.bf16.msra.mxu0 %v916
      %1136 = vmatprep.subr.bf16.mxu0 0
      %1137 = vmatpush1.bf16.msra.mxu0 %v913
      %1138 = vmatprep.subr.bf16.mxu0 0
      %1139 = vmatpush1.bf16.msra.mxu0 %v910
      %1140 = vmatprep.subr.bf16.mxu0 0
      %1141 = vmatpush1.bf16.msra.mxu0 %v907
      %1142 = vmatprep.subr.bf16.mxu0 0
      %1143 = vmatpush1.bf16.msra.mxu0 %v904
      %1144 = vmatprep.subr.bf16.mxu0 0
      %1145 = vmatpush1.bf16.msra.mxu0 %v901
      %1146 = vmatprep.subr.bf16.mxu0 0
      %1147 = vmatpush1.bf16.msra.mxu0 %v898
      %1148 = vmatprep.subr.bf16.mxu0 0
      %1149 = vmatpush1.bf16.msra.mxu0 %v895
      %1150 = vmatprep.subr.bf16.mxu0 0
      %1151 = vmatpush2.bf16.msra.mxu0 0
      %1152 = vmatprep.subr.bf16.mxu0 0
      %1153 = vmatpush2.bf16.msra.mxu0 0
      %1154 = vmatprep.subr.bf16.mxu0 0
      %1155 = vmatpush2.bf16.msra.mxu0 0
      %1156 = vmatprep.subr.bf16.mxu0 0
      %1157 = vmatpush2.bf16.msra.mxu0 0
      %1158 = vmatprep.subr.bf16.mxu0 0
      %1159 = vmatpush2.bf16.msra.mxu0 0
      %1160 = vmatprep.subr.bf16.mxu0 0
      %1161 = vmatpush2.bf16.msra.mxu0 0
      %1162 = vmatprep.subr.bf16.mxu0 0
      %1163 = vmatpush2.bf16.msra.mxu0 0
      %1164 = vmatprep.subr.bf16.mxu0 0
      %1165 = vmatpush2.bf16.msra.mxu0 0
      %1166 = vmatprep.mubr.bf16.mxu0 0
      %1167 = vmatmul.mubr.bf16.gmra.mxu0 %v748
      %v1168 = vpop.f32.mrf.mxu0
      %v1169 = vadd.f32 %v809, %v1168
      %v1170 = vpop.f32.mrf.mxu0
      %v1171 = vpop.f32.mrf.mxu0
      %v1172 = vadd.f32 %v809, %v1171
      %v1173 = vpop.f32.mrf.mxu0
      %1174 = vmatprep.mubr.bf16.mxu0 0
      %1175 = vmatmul.mubr.bf16.gmra.mxu0 %v749
      %v1176 = vpop.f32.mrf.mxu0
      %v1177 = vadd.f32 %v809, %v1176
      %v1178 = vpop.f32.mrf.mxu0
      %v1179 = vpop.f32.mrf.mxu0
      %v1180 = vadd.f32 %v809, %v1179
      %v1181 = vpop.f32.mrf.mxu0
      %1182 = vmatprep.mubr.bf16.mxu0 0
      %1183 = vmatmul.mubr.bf16.gmra.mxu0 %v750
      %v1184 = vpop.f32.mrf.mxu0
      %v1185 = vadd.f32 %v809, %v1184
      %v1186 = vpop.f32.mrf.mxu0
      %v1187 = vpop.f32.mrf.mxu0
      %v1188 = vadd.f32 %v809, %v1187
      %v1189 = vpop.f32.mrf.mxu0
      %1190 = vmatprep.mubr.bf16.mxu0 0
      %1191 = vmatmul.mubr.bf16.gmra.mxu0 %v751
      %v1192 = vpop.f32.mrf.mxu0
      %v1193 = vadd.f32 %v809, %v1192
      %v1194 = vpop.f32.mrf.mxu0
      %v1195 = vpop.f32.mrf.mxu0
      %v1196 = vadd.f32 %v809, %v1195
      %v1197 = vpop.f32.mrf.mxu0
      %1198 = vmatprep.mubr.bf16.mxu0 0
      %1199 = vmatmul.mubr.bf16.gmra.mxu0 %v752
      %v1200 = vpop.f32.mrf.mxu0
      %v1201 = vadd.f32 %v809, %v1200
      %v1202 = vpop.f32.mrf.mxu0
      %v1203 = vpop.f32.mrf.mxu0
      %v1204 = vadd.f32 %v809, %v1203
      %v1205 = vpop.f32.mrf.mxu0
      %1206 = vmatprep.mubr.bf16.mxu0 0
      %1207 = vmatmul.mubr.bf16.gmra.mxu0 %v753
      %v1208 = vpop.f32.mrf.mxu0
      %v1209 = vadd.f32 %v809, %v1208
      %v1210 = vpop.f32.mrf.mxu0
      %v1211 = vpop.f32.mrf.mxu0
      %v1212 = vadd.f32 %v809, %v1211
      %v1213 = vpop.f32.mrf.mxu0
      %1214 = vmatprep.mubr.bf16.mxu0 0
      %1215 = vmatmul.mubr.bf16.gmra.mxu0 %v754
      %v1216 = vpop.f32.mrf.mxu0
      %v1217 = vadd.f32 %v809, %v1216
      %v1218 = vpop.f32.mrf.mxu0
      %v1219 = vpop.f32.mrf.mxu0
      %v1220 = vadd.f32 %v809, %v1219
      %v1221 = vpop.f32.mrf.mxu0
      %1222 = vmatprep.mubr.bf16.mxu0 0
      %1223 = vmatmul.mubr.bf16.gmra.mxu0 %v755
      %v1224 = vpop.f32.mrf.mxu0
      %v1225 = vadd.f32 %v809, %v1224
      %v1226 = vpop.f32.mrf.mxu0
      %v1227 = vpop.f32.mrf.mxu0
      %v1228 = vadd.f32 %v809, %v1227
      %v1229 = vpop.f32.mrf.mxu0
      %1230 = vmatprep.mubr.bf16.mxu0 0
      %1231 = vmatmul.mubr.bf16.gmra.mxu0 %v756
      %v1232 = vpop.f32.mrf.mxu0
      %v1233 = vadd.f32 %v809, %v1232
      %v1234 = vpop.f32.mrf.mxu0
      %v1235 = vpop.f32.mrf.mxu0
      %v1236 = vadd.f32 %v809, %v1235
      %v1237 = vpop.f32.mrf.mxu0
      %1238 = vmatprep.mubr.bf16.mxu0 0
      %1239 = vmatmul.mubr.bf16.gmra.mxu0 %v757
      %v1240 = vpop.f32.mrf.mxu0
      %v1241 = vadd.f32 %v809, %v1240
      %v1242 = vpop.f32.mrf.mxu0
      %v1243 = vpop.f32.mrf.mxu0
      %v1244 = vadd.f32 %v809, %v1243
      %v1245 = vpop.f32.mrf.mxu0
      %1246 = vmatprep.mubr.bf16.mxu0 0
      %1247 = vmatmul.mubr.bf16.gmra.mxu0 %v758
      %v1248 = vpop.f32.mrf.mxu0
      %v1249 = vadd.f32 %v809, %v1248
      %v1250 = vpop.f32.mrf.mxu0
      %v1251 = vpop.f32.mrf.mxu0
      %v1252 = vadd.f32 %v809, %v1251
      %v1253 = vpop.f32.mrf.mxu0
      %1254 = vmatprep.mubr.bf16.mxu0 0
      %1255 = vmatmul.mubr.bf16.gmra.mxu0 %v759
      %v1256 = vpop.f32.mrf.mxu0
      %v1257 = vadd.f32 %v809, %v1256
      %v1258 = vpop.f32.mrf.mxu0
      %v1259 = vpop.f32.mrf.mxu0
      %v1260 = vadd.f32 %v809, %v1259
      %v1261 = vpop.f32.mrf.mxu0
      %1262 = vmatprep.mubr.bf16.mxu0 0
      %1263 = vmatmul.mubr.bf16.gmra.mxu0 %v760
      %v1264 = vpop.f32.mrf.mxu0
      %v1265 = vadd.f32 %v809, %v1264
      %v1266 = vpop.f32.mrf.mxu0
      %v1267 = vpop.f32.mrf.mxu0
      %v1268 = vadd.f32 %v809, %v1267
      %v1269 = vpop.f32.mrf.mxu0
      %1270 = vmatprep.mubr.bf16.mxu0 0
      %1271 = vmatmul.mubr.bf16.gmra.mxu0 %v761
      %v1272 = vpop.f32.mrf.mxu0
      %v1273 = vadd.f32 %v809, %v1272
      %v1274 = vpop.f32.mrf.mxu0
      %v1275 = vpop.f32.mrf.mxu0
      %v1276 = vadd.f32 %v809, %v1275
      %v1277 = vpop.f32.mrf.mxu0
      %1278 = vmatprep.mubr.bf16.mxu0 0
      %1279 = vmatmul.mubr.bf16.gmra.mxu0 %v762
      %v1280 = vpop.f32.mrf.mxu0
      %v1281 = vadd.f32 %v809, %v1280
      %v1282 = vpop.f32.mrf.mxu0
      %v1283 = vpop.f32.mrf.mxu0
      %v1284 = vadd.f32 %v809, %v1283
      %v1285 = vpop.f32.mrf.mxu0
      %1286 = vmatprep.mubr.bf16.mxu0 0
      %1287 = vmatmul.mubr.bf16.gmra.mxu0 %v763
      %v1288 = vpop.f32.mrf.mxu0
      %v1289 = vadd.f32 %v809, %v1288
      %v1290 = vpop.f32.mrf.mxu0
      %v1291 = vpop.f32.mrf.mxu0
      %v1292 = vadd.f32 %v809, %v1291
      %v1293 = vpop.f32.mrf.mxu0
      %1294 = vdwg.mxu0
      %v1295 = vpack.c.bf16 %v980, %v976
      %v1296 = vpack.c.bf16 %v990, %v986
      %v1297 = vpack.c.bf16 %v1000, %v996
      %v1298 = vpack.c.bf16 %v1010, %v1006
      %v1299 = vpack.c.bf16 %v1020, %v1016
      %v1300 = vpack.c.bf16 %v1030, %v1026
      %v1301 = vpack.c.bf16 %v1040, %v1036
      %v1302 = vpack.c.bf16 %v1050, %v1046
      %v1303 = vpack.c.bf16 %v1060, %v1056
      %v1304 = vpack.c.bf16 %v1070, %v1066
      %v1305 = vpack.c.bf16 %v1080, %v1076
      %v1306 = vpack.c.bf16 %v1090, %v1086
      %v1307 = vpack.c.bf16 %v1100, %v1096
      %v1308 = vpack.c.bf16 %v1110, %v1106
      %v1309 = vpack.c.bf16 %v1120, %v1116
      %v1310 = vpack.c.bf16 %v1130, %v1126
      %v1311 = vpack.c.bf16 %v982, %v978
      %v1312 = vpack.c.bf16 %v992, %v988
      %v1313 = vpack.c.bf16 %v1002, %v998
      %v1314 = vpack.c.bf16 %v1012, %v1008
      %v1315 = vpack.c.bf16 %v1022, %v1018
      %v1316 = vpack.c.bf16 %v1032, %v1028
      %v1317 = vpack.c.bf16 %v1042, %v1038
      %v1318 = vpack.c.bf16 %v1052, %v1048
      %v1319 = vpack.c.bf16 %v1062, %v1058
      %v1320 = vpack.c.bf16 %v1072, %v1068
      %v1321 = vpack.c.bf16 %v1082, %v1078
      %v1322 = vpack.c.bf16 %v1092, %v1088
      %v1323 = vpack.c.bf16 %v1102, %v1098
      %v1324 = vpack.c.bf16 %v1112, %v1108
      %v1325 = vpack.c.bf16 %v1122, %v1118
      %v1326 = vpack.c.bf16 %v1132, %v1128
      %v1327 = vpack.c.bf16 %v1172, %v1169
      %v1328 = vpack.c.bf16 %v1180, %v1177
      %v1329 = vpack.c.bf16 %v1188, %v1185
      %v1330 = vpack.c.bf16 %v1196, %v1193
      %v1331 = vpack.c.bf16 %v1204, %v1201
      %v1332 = vpack.c.bf16 %v1212, %v1209
      %v1333 = vpack.c.bf16 %v1220, %v1217
      %v1334 = vpack.c.bf16 %v1228, %v1225
      %v1335 = vpack.c.bf16 %v1236, %v1233
      %v1336 = vpack.c.bf16 %v1244, %v1241
      %v1337 = vpack.c.bf16 %v1252, %v1249
      %v1338 = vpack.c.bf16 %v1260, %v1257
      %v1339 = vpack.c.bf16 %v1268, %v1265
      %v1340 = vpack.c.bf16 %v1276, %v1273
      %v1341 = vpack.c.bf16 %v1284, %v1281
      %v1342 = vpack.c.bf16 %v1292, %v1289
      %v1343 = vld [vmem:[%s6] sm:$0xf]
      %v1344 = vld [vmem:[%s6 + $0x4] sm:$0xf]
      %v1345 = vld [vmem:[%s6 + $0x8] sm:$0xf]
      %v1346 = vld [vmem:[%s6 + $0xc] sm:$0xf]
      %v1347 = vld [vmem:[%s6 + $0x10] sm:$0xf]
      %v1348 = vld [vmem:[%s6 + $0x14] sm:$0xf]
      %v1349 = vld [vmem:[%s6 + $0x18] sm:$0xf]
      %v1350 = vld [vmem:[%s6 + $0x1c] sm:$0xf]
      %v1351 = vld [vmem:[%s6 + $0x20] sm:$0xf]
      %v1352 = vld [vmem:[%s6 + $0x24] sm:$0xf]
      %v1353 = vld [vmem:[%s6 + $0x28] sm:$0xf]
      %v1354 = vld [vmem:[%s6 + $0x2c] sm:$0xf]
      %v1355 = vld [vmem:[%s6 + $0x30] sm:$0xf]
      %v1356 = vld [vmem:[%s6 + $0x34] sm:$0xf]
      %v1357 = vld [vmem:[%s6 + $0x38] sm:$0xf]
      %v1358 = vld [vmem:[%s6 + $0x3c] sm:$0xf]
      %v1359 = vld [vmem:[%s7] sm:$0x1]
      %1360 = vmatprep.subr.bf16.mxu0 0
      %1361 = vmatpush1.bf16.xpose.msra.mxu0 %v1318
      %1362 = vmatprep.subr.bf16.mxu0 0
      %1363 = vmatpush1.bf16.xpose.msra.mxu0 %v1317
      %1364 = vmatprep.subr.bf16.mxu0 0
      %1365 = vmatpush1.bf16.xpose.msra.mxu0 %v1316
      %1366 = vmatprep.subr.bf16.mxu0 0
      %1367 = vmatpush1.bf16.xpose.msra.mxu0 %v1315
      %1368 = vmatprep.subr.bf16.mxu0 0
      %1369 = vmatpush1.bf16.xpose.msra.mxu0 %v1314
      %1370 = vmatprep.subr.bf16.mxu0 0
      %1371 = vmatpush1.bf16.xpose.msra.mxu0 %v1313
      %1372 = vmatprep.subr.bf16.mxu0 0
      %1373 = vmatpush1.bf16.xpose.msra.mxu0 %v1312
      %1374 = vmatprep.subr.bf16.mxu0 0
      %1375 = vmatpush1.bf16.xpose.msra.mxu0 %v1311
      %1376 = vmatprep.subr.bf16.mxu0 0
      %1377 = vmatpush2.bf16.xpose.msra.mxu0 %v1326
      %1378 = vmatprep.subr.bf16.mxu0 0
      %1379 = vmatpush2.bf16.xpose.msra.mxu0 %v1325
      %1380 = vmatprep.subr.bf16.mxu0 0
      %1381 = vmatpush2.bf16.xpose.msra.mxu0 %v1324
      %1382 = vmatprep.subr.bf16.mxu0 0
      %1383 = vmatpush2.bf16.xpose.msra.mxu0 %v1323
      %1384 = vmatprep.subr.bf16.mxu0 0
      %1385 = vmatpush2.bf16.xpose.msra.mxu0 %v1322
      %1386 = vmatprep.subr.bf16.mxu0 0
      %1387 = vmatpush2.bf16.xpose.msra.mxu0 %v1321
      %1388 = vmatprep.subr.bf16.mxu0 0
      %1389 = vmatpush2.bf16.xpose.msra.mxu0 %v1320
      %1390 = vmatprep.subr.bf16.mxu0 0
      %1391 = vmatpush2.bf16.xpose.msra.mxu0 %v1319
      %1392 = vmatprep.mubr.bf16.mxu0 0
      %1393 = vmatmul.mubr.bf16.gmra.mxu0 %v1295
      %v1394 = vpop.f32.mrf.mxu0
      %v1395 = vadd.f32 0.0, %v1394
      %v1396 = vpop.f32.mrf.mxu0
      %v1397 = vadd.f32 0.0, %v1396
      %v1398 = vpop.f32.mrf.mxu0
      %v1399 = vadd.f32 0.0, %v1398
      %v1400 = vpop.f32.mrf.mxu0
      %v1401 = vadd.f32 0.0, %v1400
      %1402 = vmatprep.mubr.bf16.mxu0 0
      %1403 = vmatmul.mubr.bf16.gmra.mxu0 %v1296
      %v1404 = vpop.f32.mrf.mxu0
      %v1405 = vadd.f32 0.0, %v1404
      %v1406 = vpop.f32.mrf.mxu0
      %v1407 = vadd.f32 0.0, %v1406
      %v1408 = vpop.f32.mrf.mxu0
      %v1409 = vadd.f32 0.0, %v1408
      %v1410 = vpop.f32.mrf.mxu0
      %v1411 = vadd.f32 0.0, %v1410
      %1412 = vmatprep.mubr.bf16.mxu0 0
      %1413 = vmatmul.mubr.bf16.gmra.mxu0 %v1297
      %v1414 = vpop.f32.mrf.mxu0
      %v1415 = vadd.f32 0.0, %v1414
      %v1416 = vpop.f32.mrf.mxu0
      %v1417 = vadd.f32 0.0, %v1416
      %v1418 = vpop.f32.mrf.mxu0
      %v1419 = vadd.f32 0.0, %v1418
      %v1420 = vpop.f32.mrf.mxu0
      %v1421 = vadd.f32 0.0, %v1420
      %1422 = vmatprep.mubr.bf16.mxu0 0
      %1423 = vmatmul.mubr.bf16.gmra.mxu0 %v1298
      %v1424 = vpop.f32.mrf.mxu0
      %v1425 = vadd.f32 0.0, %v1424
      %v1426 = vpop.f32.mrf.mxu0
      %v1427 = vadd.f32 0.0, %v1426
      %v1428 = vpop.f32.mrf.mxu0
      %v1429 = vadd.f32 0.0, %v1428
      %v1430 = vpop.f32.mrf.mxu0
      %v1431 = vadd.f32 0.0, %v1430
      %1432 = vmatprep.mubr.bf16.mxu0 0
      %1433 = vmatmul.mubr.bf16.gmra.mxu0 %v1299
      %v1434 = vpop.f32.mrf.mxu0
      %v1435 = vadd.f32 0.0, %v1434
      %v1436 = vpop.f32.mrf.mxu0
      %v1437 = vadd.f32 0.0, %v1436
      %v1438 = vpop.f32.mrf.mxu0
      %v1439 = vadd.f32 0.0, %v1438
      %v1440 = vpop.f32.mrf.mxu0
      %v1441 = vadd.f32 0.0, %v1440
      %1442 = vmatprep.mubr.bf16.mxu0 0
      %1443 = vmatmul.mubr.bf16.gmra.mxu0 %v1300
      %v1444 = vpop.f32.mrf.mxu0
      %v1445 = vadd.f32 0.0, %v1444
      %v1446 = vpop.f32.mrf.mxu0
      %v1447 = vadd.f32 0.0, %v1446
      %v1448 = vpop.f32.mrf.mxu0
      %v1449 = vadd.f32 0.0, %v1448
      %v1450 = vpop.f32.mrf.mxu0
      %v1451 = vadd.f32 0.0, %v1450
      %1452 = vmatprep.mubr.bf16.mxu0 0
      %1453 = vmatmul.mubr.bf16.gmra.mxu0 %v1301
      %v1454 = vpop.f32.mrf.mxu0
      %v1455 = vadd.f32 0.0, %v1454
      %v1456 = vpop.f32.mrf.mxu0
      %v1457 = vadd.f32 0.0, %v1456
      %v1458 = vpop.f32.mrf.mxu0
      %v1459 = vadd.f32 0.0, %v1458
      %v1460 = vpop.f32.mrf.mxu0
      %v1461 = vadd.f32 0.0, %v1460
      %1462 = vmatprep.mubr.bf16.mxu0 0
      %1463 = vmatmul.mubr.bf16.gmra.mxu0 %v1302
      %v1464 = vpop.f32.mrf.mxu0
      %v1465 = vadd.f32 0.0, %v1464
      %v1466 = vpop.f32.mrf.mxu0
      %v1467 = vadd.f32 0.0, %v1466
      %v1468 = vpop.f32.mrf.mxu0
      %v1469 = vadd.f32 0.0, %v1468
      %v1470 = vpop.f32.mrf.mxu0
      %v1471 = vadd.f32 0.0, %v1470
      %1472 = vdwg.mxu0
      %v1473 = vmax.f32 %v1395, %v1397
      %1474 = vmax.xlane.f32.xlu0 %v1473
      %v1475 = vpop.xlane.xlu0 %1474
      %v1476 = vmax.f32 %v1399, %v1401
      %1477 = vmax.xlane.f32.xlu0 %v1476
      %v1478 = vpop.xlane.xlu0 %1477
      %v1479 = vmax.f32 %v1405, %v1407
      %1480 = vmax.xlane.f32.xlu0 %v1479
      %v1481 = vpop.xlane.xlu0 %1480
      %v1482 = vmax.f32 %v1409, %v1411
      %1483 = vmax.xlane.f32.xlu0 %v1482
      %v1484 = vpop.xlane.xlu0 %1483
      %v1485 = vmax.f32 %v1415, %v1417
      %1486 = vmax.xlane.f32.xlu0 %v1485
      %v1487 = vpop.xlane.xlu0 %1486
      %v1488 = vmax.f32 %v1419, %v1421
      %1489 = vmax.xlane.f32.xlu0 %v1488
      %v1490 = vpop.xlane.xlu0 %1489
      %v1491 = vmax.f32 %v1425, %v1427
      %1492 = vmax.xlane.f32.xlu0 %v1491
      %v1493 = vpop.xlane.xlu0 %1492
      %v1494 = vmax.f32 %v1429, %v1431
      %1495 = vmax.xlane.f32.xlu0 %v1494
      %v1496 = vpop.xlane.xlu0 %1495
      %v1497 = vmax.f32 %v1435, %v1437
      %1498 = vmax.xlane.f32.xlu0 %v1497
      %v1499 = vpop.xlane.xlu0 %1498
      %v1500 = vmax.f32 %v1439, %v1441
      %1501 = vmax.xlane.f32.xlu0 %v1500
      %v1502 = vpop.xlane.xlu0 %1501
      %v1503 = vmax.f32 %v1445, %v1447
      %1504 = vmax.xlane.f32.xlu0 %v1503
      %v1505 = vpop.xlane.xlu0 %1504
      %v1506 = vmax.f32 %v1449, %v1451
      %1507 = vmax.xlane.f32.xlu0 %v1506
      %v1508 = vpop.xlane.xlu0 %1507
      %v1509 = vmax.f32 %v1455, %v1457
      %1510 = vmax.xlane.f32.xlu0 %v1509
      %v1511 = vpop.xlane.xlu0 %1510
      %v1512 = vmax.f32 %v1459, %v1461
      %1513 = vmax.xlane.f32.xlu0 %v1512
      %v1514 = vpop.xlane.xlu0 %1513
      %v1515 = vmax.f32 %v1465, %v1467
      %1516 = vmax.xlane.f32.xlu0 %v1515
      %v1517 = vpop.xlane.xlu0 %1516
      %v1518 = vmax.f32 %v1469, %v1471
      %1519 = vmax.xlane.f32.xlu0 %v1518
      %v1520 = vpop.xlane.xlu0 %1519
      %v1521 = vsub.f32 %v1395, %v1475
      %v1522 = vsub.f32 %v1397, %v1475
      %v1523 = vsub.f32 %v1399, %v1478
      %v1524 = vsub.f32 %v1401, %v1478
      %v1525 = vsub.f32 %v1405, %v1481
      %v1526 = vsub.f32 %v1407, %v1481
      %v1527 = vsub.f32 %v1409, %v1484
      %v1528 = vsub.f32 %v1411, %v1484
      %v1529 = vsub.f32 %v1415, %v1487
      %v1530 = vsub.f32 %v1417, %v1487
      %v1531 = vsub.f32 %v1419, %v1490
      %v1532 = vsub.f32 %v1421, %v1490
      %v1533 = vsub.f32 %v1425, %v1493
      %v1534 = vsub.f32 %v1427, %v1493
      %v1535 = vsub.f32 %v1429, %v1496
      %v1536 = vsub.f32 %v1431, %v1496
      %v1537 = vsub.f32 %v1435, %v1499
      %v1538 = vsub.f32 %v1437, %v1499
      %v1539 = vsub.f32 %v1439, %v1502
      %v1540 = vsub.f32 %v1441, %v1502
      %v1541 = vsub.f32 %v1445, %v1505
      %v1542 = vsub.f32 %v1447, %v1505
      %v1543 = vsub.f32 %v1449, %v1508
      %v1544 = vsub.f32 %v1451, %v1508
      %v1545 = vsub.f32 %v1455, %v1511
      %v1546 = vsub.f32 %v1457, %v1511
      %v1547 = vsub.f32 %v1459, %v1514
      %v1548 = vsub.f32 %v1461, %v1514
      %v1549 = vsub.f32 %v1465, %v1517
      %v1550 = vsub.f32 %v1467, %v1517
      %v1551 = vsub.f32 %v1469, %v1520
      %v1552 = vsub.f32 %v1471, %v1520
      %v1553 = vmul.f32 %v1521, 1.442695
      %v1554 = vpow.pop %v1553
      %v1555 = vmul.f32 %v1522, 1.442695
      %v1556 = vpow.pop %v1555
      %v1557 = vmul.f32 %v1523, 1.442695
      %v1558 = vpow.pop %v1557
      %v1559 = vmul.f32 %v1524, 1.442695
      %v1560 = vpow.pop %v1559
      %v1561 = vmul.f32 %v1525, 1.442695
      %v1562 = vpow.pop %v1561
      %v1563 = vmul.f32 %v1526, 1.442695
      %v1564 = vpow.pop %v1563
      %v1565 = vmul.f32 %v1527, 1.442695
      %v1566 = vpow.pop %v1565
      %v1567 = vmul.f32 %v1528, 1.442695
      %v1568 = vpow.pop %v1567
      %v1569 = vmul.f32 %v1529, 1.442695
      %v1570 = vpow.pop %v1569
      %v1571 = vmul.f32 %v1530, 1.442695
      %v1572 = vpow.pop %v1571
      %v1573 = vmul.f32 %v1531, 1.442695
      %v1574 = vpow.pop %v1573
      %v1575 = vmul.f32 %v1532, 1.442695
      %v1576 = vpow.pop %v1575
      %v1577 = vmul.f32 %v1533, 1.442695
      %v1578 = vpow.pop %v1577
      %v1579 = vmul.f32 %v1534, 1.442695
      %v1580 = vpow.pop %v1579
      %v1581 = vmul.f32 %v1535, 1.442695
      %v1582 = vpow.pop %v1581
      %v1583 = vmul.f32 %v1536, 1.442695
      %v1584 = vpow.pop %v1583
      %v1585 = vmul.f32 %v1537, 1.442695
      %v1586 = vpow.pop %v1585
      %v1587 = vmul.f32 %v1538, 1.442695
      %v1588 = vpow.pop %v1587
      %v1589 = vmul.f32 %v1539, 1.442695
      %v1590 = vpow.pop %v1589
      %v1591 = vmul.f32 %v1540, 1.442695
      %v1592 = vpow.pop %v1591
      %v1593 = vmul.f32 %v1541, 1.442695
      %v1594 = vpow.pop %v1593
      %v1595 = vmul.f32 %v1542, 1.442695
      %v1596 = vpow.pop %v1595
      %v1597 = vmul.f32 %v1543, 1.442695
      %v1598 = vpow.pop %v1597
      %v1599 = vmul.f32 %v1544, 1.442695
      %v1600 = vpow.pop %v1599
      %v1601 = vmul.f32 %v1545, 1.442695
      %v1602 = vpow.pop %v1601
      %v1603 = vmul.f32 %v1546, 1.442695
      %v1604 = vpow.pop %v1603
      %v1605 = vmul.f32 %v1547, 1.442695
      %v1606 = vpow.pop %v1605
      %v1607 = vmul.f32 %v1548, 1.442695
      %v1608 = vpow.pop %v1607
      %v1609 = vmul.f32 %v1549, 1.442695
      %v1610 = vpow.pop %v1609
      %v1611 = vmul.f32 %v1550, 1.442695
      %v1612 = vpow.pop %v1611
      %v1613 = vmul.f32 %v1551, 1.442695
      %v1614 = vpow.pop %v1613
      %v1615 = vmul.f32 %v1552, 1.442695
      %v1616 = vpow.pop %v1615
      %v1617 = vadd.f32 %v1554, %v1556
      %1618 = vadd.xlane.f32.xlu0 %v1617
      %v1619 = vpop.xlane.xlu0 %1618
      %v1620 = vadd.f32 %v1558, %v1560
      %1621 = vadd.xlane.f32.xlu0 %v1620
      %v1622 = vpop.xlane.xlu0 %1621
      %v1623 = vadd.f32 %v1562, %v1564
      %1624 = vadd.xlane.f32.xlu0 %v1623
      %v1625 = vpop.xlane.xlu0 %1624
      %v1626 = vadd.f32 %v1566, %v1568
      %1627 = vadd.xlane.f32.xlu0 %v1626
      %v1628 = vpop.xlane.xlu0 %1627
      %v1629 = vadd.f32 %v1570, %v1572
      %1630 = vadd.xlane.f32.xlu0 %v1629
      %v1631 = vpop.xlane.xlu0 %1630
      %v1632 = vadd.f32 %v1574, %v1576
      %1633 = vadd.xlane.f32.xlu0 %v1632
      %v1634 = vpop.xlane.xlu0 %1633
      %v1635 = vadd.f32 %v1578, %v1580
      %1636 = vadd.xlane.f32.xlu0 %v1635
      %v1637 = vpop.xlane.xlu0 %1636
      %v1638 = vadd.f32 %v1582, %v1584
      %1639 = vadd.xlane.f32.xlu0 %v1638
      %v1640 = vpop.xlane.xlu0 %1639
      %v1641 = vadd.f32 %v1586, %v1588
      %1642 = vadd.xlane.f32.xlu0 %v1641
      %v1643 = vpop.xlane.xlu0 %1642
      %v1644 = vadd.f32 %v1590, %v1592
      %1645 = vadd.xlane.f32.xlu0 %v1644
      %v1646 = vpop.xlane.xlu0 %1645
      %v1647 = vadd.f32 %v1594, %v1596
      %1648 = vadd.xlane.f32.xlu0 %v1647
      %v1649 = vpop.xlane.xlu0 %1648
      %v1650 = vadd.f32 %v1598, %v1600
      %1651 = vadd.xlane.f32.xlu0 %v1650
      %v1652 = vpop.xlane.xlu0 %1651
      %v1653 = vadd.f32 %v1602, %v1604
      %1654 = vadd.xlane.f32.xlu0 %v1653
      %v1655 = vpop.xlane.xlu0 %1654
      %v1656 = vadd.f32 %v1606, %v1608
      %1657 = vadd.xlane.f32.xlu0 %v1656
      %v1658 = vpop.xlane.xlu0 %1657
      %v1659 = vadd.f32 %v1610, %v1612
      %1660 = vadd.xlane.f32.xlu0 %v1659
      %v1661 = vpop.xlane.xlu0 %1660
      %v1662 = vadd.f32 %v1614, %v1616
      %1663 = vadd.xlane.f32.xlu0 %v1662
      %v1664 = vpop.xlane.xlu0 %1663
      %v1665 = vpack.c.bf16 %v1558, %v1554
      %v1666 = vpack.c.bf16 %v1560, %v1556
      %v1667 = vpack.c.bf16 %v1566, %v1562
      %v1668 = vpack.c.bf16 %v1568, %v1564
      %v1669 = vpack.c.bf16 %v1574, %v1570
      %v1670 = vpack.c.bf16 %v1576, %v1572
      %v1671 = vpack.c.bf16 %v1582, %v1578
      %v1672 = vpack.c.bf16 %v1584, %v1580
      %v1673 = vpack.c.bf16 %v1590, %v1586
      %v1674 = vpack.c.bf16 %v1592, %v1588
      %v1675 = vpack.c.bf16 %v1598, %v1594
      %v1676 = vpack.c.bf16 %v1600, %v1596
      %v1677 = vpack.c.bf16 %v1606, %v1602
      %v1678 = vpack.c.bf16 %v1608, %v1604
      %v1679 = vpack.c.bf16 %v1614, %v1610
      %v1680 = vpack.c.bf16 %v1616, %v1612
      %1681 = vmatprep.subr.bf16.mxu0 0
      %1682 = vmatpush1.bf16.msra.mxu0 %v1334
      %1683 = vmatprep.subr.bf16.mxu0 0
      %1684 = vmatpush1.bf16.msra.mxu0 %v1333
      %1685 = vmatprep.subr.bf16.mxu0 0
      %1686 = vmatpush1.bf16.msra.mxu0 %v1332
      %1687 = vmatprep.subr.bf16.mxu0 0
      %1688 = vmatpush1.bf16.msra.mxu0 %v1331
      %1689 = vmatprep.subr.bf16.mxu0 0
      %1690 = vmatpush1.bf16.msra.mxu0 %v1330
      %1691 = vmatprep.subr.bf16.mxu0 0
      %1692 = vmatpush1.bf16.msra.mxu0 %v1329
      %1693 = vmatprep.subr.bf16.mxu0 0
      %1694 = vmatpush1.bf16.msra.mxu0 %v1328
      %1695 = vmatprep.subr.bf16.mxu0 0
      %1696 = vmatpush1.bf16.msra.mxu0 %v1327
      %1697 = vmatprep.subr.bf16.mxu0 0
      %1698 = vmatpush2.bf16.msra.mxu0 %v1342
      %1699 = vmatprep.subr.bf16.mxu0 0
      %1700 = vmatpush2.bf16.msra.mxu0 %v1341
      %1701 = vmatprep.subr.bf16.mxu0 0
      %1702 = vmatpush2.bf16.msra.mxu0 %v1340
      %1703 = vmatprep.subr.bf16.mxu0 0
      %1704 = vmatpush2.bf16.msra.mxu0 %v1339
      %1705 = vmatprep.subr.bf16.mxu0 0
      %1706 = vmatpush2.bf16.msra.mxu0 %v1338
      %1707 = vmatprep.subr.bf16.mxu0 0
      %1708 = vmatpush2.bf16.msra.mxu0 %v1337
      %1709 = vmatprep.subr.bf16.mxu0 0
      %1710 = vmatpush2.bf16.msra.mxu0 %v1336
      %1711 = vmatprep.subr.bf16.mxu0 0
      %1712 = vmatpush2.bf16.msra.mxu0 %v1335
      %1713 = vmatprep.mubr.bf16.mxu0 %v1666
      %1714 = vmatmul.mubr.bf16.gmra.mxu0 %v1665
      %v1715 = vpop.f32.mrf.mxu0
      %v1716 = vadd.f32 0.0, %v1715
      %v1717 = vpop.f32.mrf.mxu0
      %v1718 = vpop.f32.mrf.mxu0
      %v1719 = vadd.f32 0.0, %v1718
      %v1720 = vpop.f32.mrf.mxu0
      %1721 = vmatprep.mubr.bf16.mxu0 %v1668
      %1722 = vmatmul.mubr.bf16.gmra.mxu0 %v1667
      %v1723 = vpop.f32.mrf.mxu0
      %v1724 = vadd.f32 0.0, %v1723
      %v1725 = vpop.f32.mrf.mxu0
      %v1726 = vpop.f32.mrf.mxu0
      %v1727 = vadd.f32 0.0, %v1726
      %v1728 = vpop.f32.mrf.mxu0
      %1729 = vmatprep.mubr.bf16.mxu0 %v1670
      %1730 = vmatmul.mubr.bf16.gmra.mxu0 %v1669
      %v1731 = vpop.f32.mrf.mxu0
      %v1732 = vadd.f32 0.0, %v1731
      %v1733 = vpop.f32.mrf.mxu0
      %v1734 = vpop.f32.mrf.mxu0
      %v1735 = vadd.f32 0.0, %v1734
      %v1736 = vpop.f32.mrf.mxu0
      %1737 = vmatprep.mubr.bf16.mxu0 %v1672
      %1738 = vmatmul.mubr.bf16.gmra.mxu0 %v1671
      %v1739 = vpop.f32.mrf.mxu0
      %v1740 = vadd.f32 0.0, %v1739
      %v1741 = vpop.f32.mrf.mxu0
      %v1742 = vpop.f32.mrf.mxu0
      %v1743 = vadd.f32 0.0, %v1742
      %v1744 = vpop.f32.mrf.mxu0
      %1745 = vmatprep.mubr.bf16.mxu0 %v1674
      %1746 = vmatmul.mubr.bf16.gmra.mxu0 %v1673
      %v1747 = vpop.f32.mrf.mxu0
      %v1748 = vadd.f32 0.0, %v1747
      %v1749 = vpop.f32.mrf.mxu0
      %v1750 = vpop.f32.mrf.mxu0
      %v1751 = vadd.f32 0.0, %v1750
      %v1752 = vpop.f32.mrf.mxu0
      %1753 = vmatprep.mubr.bf16.mxu0 %v1676
      %1754 = vmatmul.mubr.bf16.gmra.mxu0 %v1675
      %v1755 = vpop.f32.mrf.mxu0
      %v1756 = vadd.f32 0.0, %v1755
      %v1757 = vpop.f32.mrf.mxu0
      %v1758 = vpop.f32.mrf.mxu0
      %v1759 = vadd.f32 0.0, %v1758
      %v1760 = vpop.f32.mrf.mxu0
      %1761 = vmatprep.mubr.bf16.mxu0 %v1678
      %1762 = vmatmul.mubr.bf16.gmra.mxu0 %v1677
      %v1763 = vpop.f32.mrf.mxu0
      %v1764 = vadd.f32 0.0, %v1763
      %v1765 = vpop.f32.mrf.mxu0
      %v1766 = vpop.f32.mrf.mxu0
      %v1767 = vadd.f32 0.0, %v1766
      %v1768 = vpop.f32.mrf.mxu0
      %1769 = vmatprep.mubr.bf16.mxu0 %v1680
      %1770 = vmatmul.mubr.bf16.gmra.mxu0 %v1679
      %v1771 = vpop.f32.mrf.mxu0
      %v1772 = vadd.f32 0.0, %v1771
      %v1773 = vpop.f32.mrf.mxu0
      %v1774 = vpop.f32.mrf.mxu0
      %v1775 = vadd.f32 0.0, %v1774
      %v1776 = vpop.f32.mrf.mxu0
      %1777 = vdwg.mxu0
      %v1778 = vrcp.pop %v1619
      %v1779 = vrcp.pop %v1622
      %v1780 = vrcp.pop %v1625
      %v1781 = vrcp.pop %v1628
      %v1782 = vrcp.pop %v1631
      %v1783 = vrcp.pop %v1634
      %v1784 = vrcp.pop %v1637
      %v1785 = vrcp.pop %v1640
      %v1786 = vrcp.pop %v1643
      %v1787 = vrcp.pop %v1646
      %v1788 = vrcp.pop %v1649
      %v1789 = vrcp.pop %v1652
      %v1790 = vrcp.pop %v1655
      %v1791 = vrcp.pop %v1658
      %v1792 = vrcp.pop %v1661
      %v1793 = vrcp.pop %v1664
      %v1794 = vmul.f32 %v1716, %v1778
      %v1795 = vmul.f32 %v1719, %v1779
      %v1796 = vmul.f32 %v1724, %v1780
      %v1797 = vmul.f32 %v1727, %v1781
      %v1798 = vmul.f32 %v1732, %v1782
      %v1799 = vmul.f32 %v1735, %v1783
      %v1800 = vmul.f32 %v1740, %v1784
      %v1801 = vmul.f32 %v1743, %v1785
      %v1802 = vmul.f32 %v1748, %v1786
      %v1803 = vmul.f32 %v1751, %v1787
      %v1804 = vmul.f32 %v1756, %v1788
      %v1805 = vmul.f32 %v1759, %v1789
      %v1806 = vmul.f32 %v1764, %v1790
      %v1807 = vmul.f32 %v1767, %v1791
      %v1808 = vmul.f32 %v1772, %v1792
      %v1809 = vmul.f32 %v1775, %v1793
      %v1810 = vpack.c.bf16 %v1795, %v1794
      %v1811 = vpack.c.bf16 %v1797, %v1796
      %v1812 = vpack.c.bf16 %v1799, %v1798
      %v1813 = vpack.c.bf16 %v1801, %v1800
      %v1814 = vpack.c.bf16 %v1803, %v1802
      %v1815 = vpack.c.bf16 %v1805, %v1804
      %v1816 = vpack.c.bf16 %v1807, %v1806
      %v1817 = vpack.c.bf16 %v1809, %v1808
      %v1819 = vlaneseq
      %v1820 = vshrl.u32 %v1819, 7
      %v1821 = vsub.s32 0, %v1820
      %v1822 = vrot.slane %v1359, %v1821
      %v1840 = vunpack.c.l.b16 %v1343
      %v1841 = vunpack.c.l.b16 %v1344
      %v1842 = vunpack.c.l.b16 %v1345
      %v1843 = vunpack.c.l.b16 %v1346
      %v1844 = vunpack.c.l.b16 %v1347
      %v1845 = vunpack.c.l.b16 %v1348
      %v1846 = vunpack.c.l.b16 %v1349
      %v1847 = vunpack.c.l.b16 %v1350
      %v1848 = vunpack.c.l.b16 %v1351
      %v1849 = vunpack.c.l.b16 %v1352
      %v1850 = vunpack.c.l.b16 %v1353
      %v1851 = vunpack.c.l.b16 %v1354
      %v1852 = vunpack.c.l.b16 %v1355
      %v1853 = vunpack.c.l.b16 %v1356
      %v1854 = vunpack.c.l.b16 %v1357
      %v1855 = vunpack.c.l.b16 %v1358
      %v1856 = vpack.c.b16 %v1841, %v1840
      %v1857 = vpack.c.b16 %v1843, %v1842
      %v1858 = vpack.c.b16 %v1845, %v1844
      %v1859 = vpack.c.b16 %v1847, %v1846
      %v1860 = vpack.c.b16 %v1849, %v1848
      %v1861 = vpack.c.b16 %v1851, %v1850
      %v1862 = vpack.c.b16 %v1853, %v1852
      %v1863 = vpack.c.b16 %v1855, %v1854
      %1872 = vmatprep.subr.bf16.mxu0 0
      %1873 = vmatpush1.bf16.msra.mxu0 %v1863
      %1874 = vmatprep.subr.bf16.mxu0 0
      %1875 = vmatpush1.bf16.msra.mxu0 %v1862
      %1876 = vmatprep.subr.bf16.mxu0 0
      %1877 = vmatpush1.bf16.msra.mxu0 %v1861
      %1878 = vmatprep.subr.bf16.mxu0 0
      %1879 = vmatpush1.bf16.msra.mxu0 %v1860
      %1880 = vmatprep.subr.bf16.mxu0 0
      %1881 = vmatpush1.bf16.msra.mxu0 %v1859
      %1882 = vmatprep.subr.bf16.mxu0 0
      %1883 = vmatpush1.bf16.msra.mxu0 %v1858
      %1884 = vmatprep.subr.bf16.mxu0 0
      %1885 = vmatpush1.bf16.msra.mxu0 %v1857
      %1886 = vmatprep.subr.bf16.mxu0 0
      %1887 = vmatpush1.bf16.msra.mxu0 %v1856
      %1888 = vmatprep.subr.bf16.mxu0 0
      %1889 = vmatpush2.bf16.msra.mxu0 0
      %1890 = vmatprep.subr.bf16.mxu0 0
      %1891 = vmatpush2.bf16.msra.mxu0 0
      %1892 = vmatprep.subr.bf16.mxu0 0
      %1893 = vmatpush2.bf16.msra.mxu0 0
      %1894 = vmatprep.subr.bf16.mxu0 0
      %1895 = vmatpush2.bf16.msra.mxu0 0
      %1896 = vmatprep.subr.bf16.mxu0 0
      %1897 = vmatpush2.bf16.msra.mxu0 0
      %1898 = vmatprep.subr.bf16.mxu0 0
      %1899 = vmatpush2.bf16.msra.mxu0 0
      %1900 = vmatprep.subr.bf16.mxu0 0
      %1901 = vmatpush2.bf16.msra.mxu0 0
      %1902 = vmatprep.subr.bf16.mxu0 0
      %1903 = vmatpush2.bf16.msra.mxu0 0
      %1904 = vmatprep.mubr.bf16.mxu0 0
      %1905 = vmatmul.mubr.bf16.gmra.mxu0 %v1810
      %v1906 = vpop.f32.mrf.mxu0
      %v1907 = vadd.f32 %v1822, %v1906
      %v1908 = vpop.f32.mrf.mxu0
      %v1909 = vpop.f32.mrf.mxu0
      %v1910 = vadd.f32 %v1822, %v1909
      %v1911 = vpop.f32.mrf.mxu0
      %1912 = vmatprep.mubr.bf16.mxu0 0
      %1913 = vmatmul.mubr.bf16.gmra.mxu0 %v1811
      %v1914 = vpop.f32.mrf.mxu0
      %v1915 = vadd.f32 %v1822, %v1914
      %v1916 = vpop.f32.mrf.mxu0
      %v1917 = vpop.f32.mrf.mxu0
      %v1918 = vadd.f32 %v1822, %v1917
      %v1919 = vpop.f32.mrf.mxu0
      %1920 = vmatprep.mubr.bf16.mxu0 0
      %1921 = vmatmul.mubr.bf16.gmra.mxu0 %v1812
      %v1922 = vpop.f32.mrf.mxu0
      %v1923 = vadd.f32 %v1822, %v1922
      %v1924 = vpop.f32.mrf.mxu0
      %v1925 = vpop.f32.mrf.mxu0
      %v1926 = vadd.f32 %v1822, %v1925
      %v1927 = vpop.f32.mrf.mxu0
      %1928 = vmatprep.mubr.bf16.mxu0 0
      %1929 = vmatmul.mubr.bf16.gmra.mxu0 %v1813
      %v1930 = vpop.f32.mrf.mxu0
      %v1931 = vadd.f32 %v1822, %v1930
      %v1932 = vpop.f32.mrf.mxu0
      %v1933 = vpop.f32.mrf.mxu0
      %v1934 = vadd.f32 %v1822, %v1933
      %v1935 = vpop.f32.mrf.mxu0
      %1936 = vmatprep.mubr.bf16.mxu0 0
      %1937 = vmatmul.mubr.bf16.gmra.mxu0 %v1814
      %v1938 = vpop.f32.mrf.mxu0
      %v1939 = vadd.f32 %v1822, %v1938
      %v1940 = vpop.f32.mrf.mxu0
      %v1941 = vpop.f32.mrf.mxu0
      %v1942 = vadd.f32 %v1822, %v1941
      %v1943 = vpop.f32.mrf.mxu0
      %1944 = vmatprep.mubr.bf16.mxu0 0
      %1945 = vmatmul.mubr.bf16.gmra.mxu0 %v1815
      %v1946 = vpop.f32.mrf.mxu0
      %v1947 = vadd.f32 %v1822, %v1946
      %v1948 = vpop.f32.mrf.mxu0
      %v1949 = vpop.f32.mrf.mxu0
      %v1950 = vadd.f32 %v1822, %v1949
      %v1951 = vpop.f32.mrf.mxu0
      %1952 = vmatprep.mubr.bf16.mxu0 0
      %1953 = vmatmul.mubr.bf16.gmra.mxu0 %v1816
      %v1954 = vpop.f32.mrf.mxu0
      %v1955 = vadd.f32 %v1822, %v1954
      %v1956 = vpop.f32.mrf.mxu0
      %v1957 = vpop.f32.mrf.mxu0
      %v1958 = vadd.f32 %v1822, %v1957
      %v1959 = vpop.f32.mrf.mxu0
      %1960 = vmatprep.mubr.bf16.mxu0 0
      %1961 = vmatmul.mubr.bf16.gmra.mxu0 %v1817
      %v1962 = vpop.f32.mrf.mxu0
      %v1963 = vadd.f32 %v1822, %v1962
      %v1964 = vpop.f32.mrf.mxu0
      %v1965 = vpop.f32.mrf.mxu0
      %v1966 = vadd.f32 %v1822, %v1965
      %v1967 = vpop.f32.mrf.mxu0
      %1968 = vdwg.mxu0
      %v1969 = vadd.f32 %v355, %v1907
      %v1970 = vadd.f32 %v356, %v1910
      %v1971 = vadd.f32 %v357, %v1915
      %v1972 = vadd.f32 %v358, %v1918
      %v1973 = vadd.f32 %v359, %v1923
      %v1974 = vadd.f32 %v360, %v1926
      %v1975 = vadd.f32 %v361, %v1931
      %v1976 = vadd.f32 %v362, %v1934
      %v1977 = vadd.f32 %v363, %v1939
      %v1978 = vadd.f32 %v364, %v1942
      %v1979 = vadd.f32 %v365, %v1947
      %v1980 = vadd.f32 %v366, %v1950
      %v1981 = vadd.f32 %v367, %v1955
      %v1982 = vadd.f32 %v368, %v1958
      %v1983 = vadd.f32 %v369, %v1963
      %v1984 = vadd.f32 %v370, %v1966
      %1985 = vxpose.xlu0.b32.start [1/16] %v1969, 128
      %1986 = vxpose.xlu0.b32.cont [2/16] %v1970, 128
      %1987 = vxpose.xlu0.b32.cont [3/16] %v1971, 128
      %1988 = vxpose.xlu0.b32.cont [4/16] %v1972, 128
      %1989 = vxpose.xlu0.b32.cont [5/16] %v1973, 128
      %1990 = vxpose.xlu0.b32.cont [6/16] %v1974, 128
      %1991 = vxpose.xlu0.b32.cont [7/16] %v1975, 128
      %1992 = vxpose.xlu0.b32.cont [8/16] %v1976, 128
      %1993 = vxpose.xlu0.b32.cont [9/16] %v1977, 128
      %1994 = vxpose.xlu0.b32.cont [10/16] %v1978, 128
      %1995 = vxpose.xlu0.b32.cont [11/16] %v1979, 128
      %1996 = vxpose.xlu0.b32.cont [12/16] %v1980, 128
      %1997 = vxpose.xlu0.b32.cont [13/16] %v1981, 128
      %1998 = vxpose.xlu0.b32.cont [14/16] %v1982, 128
      %1999 = vxpose.xlu0.b32.cont [15/16] %v1983, 128
      %2000 = vxpose.xlu0.b32.end [16/16] %v1984, 128
      %v2001 = vpop.trf.xlu0
      %v2002 = vpop.trf.xlu0
      %v2003 = vpop.trf.xlu0
      %v2004 = vpop.trf.xlu0
      %v2005 = vpop.trf.xlu0
      %v2006 = vpop.trf.xlu0
      %v2007 = vpop.trf.xlu0
      %v2008 = vpop.trf.xlu0
      %v2009 = vpop.trf.xlu0
      %v2010 = vpop.trf.xlu0
      %v2011 = vpop.trf.xlu0
      %v2012 = vpop.trf.xlu0
      %v2013 = vpop.trf.xlu0
      %v2014 = vpop.trf.xlu0
      %v2015 = vpop.trf.xlu0
      %v2016 = vpop.trf.xlu0
      %2017 = vst [vmem:[%s305] sm:$0xff] %v2001
      %2018 = vst [vmem:[%s305 + $0x10] sm:$0xff] %v2002
      %2019 = vst [vmem:[%s305 + $0x20] sm:$0xff] %v2003
      %2020 = vst [vmem:[%s305 + $0x30] sm:$0xff] %v2004
      %2021 = vst [vmem:[%s305 + $0x40] sm:$0xff] %v2005
      %2022 = vst [vmem:[%s305 + $0x50] sm:$0xff] %v2006
      %2023 = vst [vmem:[%s305 + $0x60] sm:$0xff] %v2007
      %2024 = vst [vmem:[%s305 + $0x70] sm:$0xff] %v2008
      %2025 = vst [vmem:[%s305 + $0x80] sm:$0xff] %v2009
      %2026 = vst [vmem:[%s305 + $0x90] sm:$0xff] %v2010
      %2027 = vst [vmem:[%s305 + $0xa0] sm:$0xff] %v2011
      %2028 = vst [vmem:[%s305 + $0xb0] sm:$0xff] %v2012
      %2029 = vst [vmem:[%s305 + $0xc0] sm:$0xff] %v2013
      %2030 = vst [vmem:[%s305 + $0xd0] sm:$0xff] %v2014
      %2031 = vst [vmem:[%s305 + $0xe0] sm:$0xff] %v2015
      %2032 = vst [vmem:[%s305 + $0xf0] sm:$0xff] %v2016
      %2033 = vmatprep.subr.bf16.mxu0 0
      %2034 = vmatpush1.bf16.xpose.msra.mxu0 %v1318
      %2035 = vmatprep.subr.bf16.mxu0 0
      %2036 = vmatpush1.bf16.xpose.msra.mxu0 %v1317
      %2037 = vmatprep.subr.bf16.mxu0 0
      %2038 = vmatpush1.bf16.xpose.msra.mxu0 %v1316
      %2039 = vmatprep.subr.bf16.mxu0 0
      %2040 = vmatpush1.bf16.xpose.msra.mxu0 %v1315
      %2041 = vmatprep.subr.bf16.mxu0 0
      %2042 = vmatpush1.bf16.xpose.msra.mxu0 %v1314
      %2043 = vmatprep.subr.bf16.mxu0 0
      %2044 = vmatpush1.bf16.xpose.msra.mxu0 %v1313
      %2045 = vmatprep.subr.bf16.mxu0 0
      %2046 = vmatpush1.bf16.xpose.msra.mxu0 %v1312
      %2047 = vmatprep.subr.bf16.mxu0 0
      %2048 = vmatpush1.bf16.xpose.msra.mxu0 %v1311
      %2049 = vmatprep.subr.bf16.mxu0 0
      %2050 = vmatpush2.bf16.xpose.msra.mxu0 %v1326
      %2051 = vmatprep.subr.bf16.mxu0 0
      %2052 = vmatpush2.bf16.xpose.msra.mxu0 %v1325
      %2053 = vmatprep.subr.bf16.mxu0 0
      %2054 = vmatpush2.bf16.xpose.msra.mxu0 %v1324
      %2055 = vmatprep.subr.bf16.mxu0 0
      %2056 = vmatpush2.bf16.xpose.msra.mxu0 %v1323
      %2057 = vmatprep.subr.bf16.mxu0 0
      %2058 = vmatpush2.bf16.xpose.msra.mxu0 %v1322
      %2059 = vmatprep.subr.bf16.mxu0 0
      %2060 = vmatpush2.bf16.xpose.msra.mxu0 %v1321
      %2061 = vmatprep.subr.bf16.mxu0 0
      %2062 = vmatpush2.bf16.xpose.msra.mxu0 %v1320
      %2063 = vmatprep.subr.bf16.mxu0 0
      %2064 = vmatpush2.bf16.xpose.msra.mxu0 %v1319
      %2065 = vmatprep.mubr.bf16.mxu0 0
      %2066 = vmatmul.mubr.bf16.gmra.mxu0 %v1303
      %v2067 = vpop.f32.mrf.mxu0
      %v2068 = vadd.f32 0.0, %v2067
      %v2069 = vpop.f32.mrf.mxu0
      %v2070 = vadd.f32 0.0, %v2069
      %v2071 = vpop.f32.mrf.mxu0
      %v2072 = vadd.f32 0.0, %v2071
      %v2073 = vpop.f32.mrf.mxu0
      %v2074 = vadd.f32 0.0, %v2073
      %2075 = vmatprep.mubr.bf16.mxu0 0
      %2076 = vmatmul.mubr.bf16.gmra.mxu0 %v1304
      %v2077 = vpop.f32.mrf.mxu0
      %v2078 = vadd.f32 0.0, %v2077
      %v2079 = vpop.f32.mrf.mxu0
      %v2080 = vadd.f32 0.0, %v2079
      %v2081 = vpop.f32.mrf.mxu0
      %v2082 = vadd.f32 0.0, %v2081
      %v2083 = vpop.f32.mrf.mxu0
      %v2084 = vadd.f32 0.0, %v2083
      %2085 = vmatprep.mubr.bf16.mxu0 0
      %2086 = vmatmul.mubr.bf16.gmra.mxu0 %v1305
      %v2087 = vpop.f32.mrf.mxu0
      %v2088 = vadd.f32 0.0, %v2087
      %v2089 = vpop.f32.mrf.mxu0
      %v2090 = vadd.f32 0.0, %v2089
      %v2091 = vpop.f32.mrf.mxu0
      %v2092 = vadd.f32 0.0, %v2091
      %v2093 = vpop.f32.mrf.mxu0
      %v2094 = vadd.f32 0.0, %v2093
      %2095 = vmatprep.mubr.bf16.mxu0 0
      %2096 = vmatmul.mubr.bf16.gmra.mxu0 %v1306
      %v2097 = vpop.f32.mrf.mxu0
      %v2098 = vadd.f32 0.0, %v2097
      %v2099 = vpop.f32.mrf.mxu0
      %v2100 = vadd.f32 0.0, %v2099
      %v2101 = vpop.f32.mrf.mxu0
      %v2102 = vadd.f32 0.0, %v2101
      %v2103 = vpop.f32.mrf.mxu0
      %v2104 = vadd.f32 0.0, %v2103
      %2105 = vmatprep.mubr.bf16.mxu0 0
      %2106 = vmatmul.mubr.bf16.gmra.mxu0 %v1307
      %v2107 = vpop.f32.mrf.mxu0
      %v2108 = vadd.f32 0.0, %v2107
      %v2109 = vpop.f32.mrf.mxu0
      %v2110 = vadd.f32 0.0, %v2109
      %v2111 = vpop.f32.mrf.mxu0
      %v2112 = vadd.f32 0.0, %v2111
      %v2113 = vpop.f32.mrf.mxu0
      %v2114 = vadd.f32 0.0, %v2113
      %2115 = vmatprep.mubr.bf16.mxu0 0
      %2116 = vmatmul.mubr.bf16.gmra.mxu0 %v1308
      %v2117 = vpop.f32.mrf.mxu0
      %v2118 = vadd.f32 0.0, %v2117
      %v2119 = vpop.f32.mrf.mxu0
      %v2120 = vadd.f32 0.0, %v2119
      %v2121 = vpop.f32.mrf.mxu0
      %v2122 = vadd.f32 0.0, %v2121
      %v2123 = vpop.f32.mrf.mxu0
      %v2124 = vadd.f32 0.0, %v2123
      %2125 = vmatprep.mubr.bf16.mxu0 0
      %2126 = vmatmul.mubr.bf16.gmra.mxu0 %v1309
      %v2127 = vpop.f32.mrf.mxu0
      %v2128 = vadd.f32 0.0, %v2127
      %v2129 = vpop.f32.mrf.mxu0
      %v2130 = vadd.f32 0.0, %v2129
      %v2131 = vpop.f32.mrf.mxu0
      %v2132 = vadd.f32 0.0, %v2131
      %v2133 = vpop.f32.mrf.mxu0
      %v2134 = vadd.f32 0.0, %v2133
      %2135 = vmatprep.mubr.bf16.mxu0 0
      %2136 = vmatmul.mubr.bf16.gmra.mxu0 %v1310
      %v2137 = vpop.f32.mrf.mxu0
      %v2138 = vadd.f32 0.0, %v2137
      %v2139 = vpop.f32.mrf.mxu0
      %v2140 = vadd.f32 0.0, %v2139
      %v2141 = vpop.f32.mrf.mxu0
      %v2142 = vadd.f32 0.0, %v2141
      %v2143 = vpop.f32.mrf.mxu0
      %v2144 = vadd.f32 0.0, %v2143
      %2145 = vdwg.mxu0
      %v2146 = vmax.f32 %v2068, %v2070
      %2147 = vmax.xlane.f32.xlu0 %v2146
      %v2148 = vpop.xlane.xlu0 %2147
      %v2149 = vmax.f32 %v2072, %v2074
      %2150 = vmax.xlane.f32.xlu0 %v2149
      %v2151 = vpop.xlane.xlu0 %2150
      %v2152 = vmax.f32 %v2078, %v2080
      %2153 = vmax.xlane.f32.xlu0 %v2152
      %v2154 = vpop.xlane.xlu0 %2153
      %v2155 = vmax.f32 %v2082, %v2084
      %2156 = vmax.xlane.f32.xlu0 %v2155
      %v2157 = vpop.xlane.xlu0 %2156
      %v2158 = vmax.f32 %v2088, %v2090
      %2159 = vmax.xlane.f32.xlu0 %v2158
      %v2160 = vpop.xlane.xlu0 %2159
      %v2161 = vmax.f32 %v2092, %v2094
      %2162 = vmax.xlane.f32.xlu0 %v2161
      %v2163 = vpop.xlane.xlu0 %2162
      %v2164 = vmax.f32 %v2098, %v2100
      %2165 = vmax.xlane.f32.xlu0 %v2164
      %v2166 = vpop.xlane.xlu0 %2165
      %v2167 = vmax.f32 %v2102, %v2104
      %2168 = vmax.xlane.f32.xlu0 %v2167
      %v2169 = vpop.xlane.xlu0 %2168
      %v2170 = vmax.f32 %v2108, %v2110
      %2171 = vmax.xlane.f32.xlu0 %v2170
      %v2172 = vpop.xlane.xlu0 %2171
      %v2173 = vmax.f32 %v2112, %v2114
      %2174 = vmax.xlane.f32.xlu0 %v2173
      %v2175 = vpop.xlane.xlu0 %2174
      %v2176 = vmax.f32 %v2118, %v2120
      %2177 = vmax.xlane.f32.xlu0 %v2176
      %v2178 = vpop.xlane.xlu0 %2177
      %v2179 = vmax.f32 %v2122, %v2124
      %2180 = vmax.xlane.f32.xlu0 %v2179
      %v2181 = vpop.xlane.xlu0 %2180
      %v2182 = vmax.f32 %v2128, %v2130
      %2183 = vmax.xlane.f32.xlu0 %v2182
      %v2184 = vpop.xlane.xlu0 %2183
      %v2185 = vmax.f32 %v2132, %v2134
      %2186 = vmax.xlane.f32.xlu0 %v2185
      %v2187 = vpop.xlane.xlu0 %2186
      %v2188 = vmax.f32 %v2138, %v2140
      %2189 = vmax.xlane.f32.xlu0 %v2188
      %v2190 = vpop.xlane.xlu0 %2189
      %v2191 = vmax.f32 %v2142, %v2144
      %2192 = vmax.xlane.f32.xlu0 %v2191
      %v2193 = vpop.xlane.xlu0 %2192
      %v2194 = vsub.f32 %v2068, %v2148
      %v2195 = vsub.f32 %v2070, %v2148
      %v2196 = vsub.f32 %v2072, %v2151
      %v2197 = vsub.f32 %v2074, %v2151
      %v2198 = vsub.f32 %v2078, %v2154
      %v2199 = vsub.f32 %v2080, %v2154
      %v2200 = vsub.f32 %v2082, %v2157
      %v2201 = vsub.f32 %v2084, %v2157
      %v2202 = vsub.f32 %v2088, %v2160
      %v2203 = vsub.f32 %v2090, %v2160
      %v2204 = vsub.f32 %v2092, %v2163
      %v2205 = vsub.f32 %v2094, %v2163
      %v2206 = vsub.f32 %v2098, %v2166
      %v2207 = vsub.f32 %v2100, %v2166
      %v2208 = vsub.f32 %v2102, %v2169
      %v2209 = vsub.f32 %v2104, %v2169
      %v2210 = vsub.f32 %v2108, %v2172
      %v2211 = vsub.f32 %v2110, %v2172
      %v2212 = vsub.f32 %v2112, %v2175
      %v2213 = vsub.f32 %v2114, %v2175
      %v2214 = vsub.f32 %v2118, %v2178
      %v2215 = vsub.f32 %v2120, %v2178
      %v2216 = vsub.f32 %v2122, %v2181
      %v2217 = vsub.f32 %v2124, %v2181
      %v2218 = vsub.f32 %v2128, %v2184
      %v2219 = vsub.f32 %v2130, %v2184
      %v2220 = vsub.f32 %v2132, %v2187
      %v2221 = vsub.f32 %v2134, %v2187
      %v2222 = vsub.f32 %v2138, %v2190
      %v2223 = vsub.f32 %v2140, %v2190
      %v2224 = vsub.f32 %v2142, %v2193
      %v2225 = vsub.f32 %v2144, %v2193
      %v2226 = vmul.f32 %v2194, 1.442695
      %v2227 = vpow.pop %v2226
      %v2228 = vmul.f32 %v2195, 1.442695
      %v2229 = vpow.pop %v2228
      %v2230 = vmul.f32 %v2196, 1.442695
      %v2231 = vpow.pop %v2230
      %v2232 = vmul.f32 %v2197, 1.442695
      %v2233 = vpow.pop %v2232
      %v2234 = vmul.f32 %v2198, 1.442695
      %v2235 = vpow.pop %v2234
      %v2236 = vmul.f32 %v2199, 1.442695
      %v2237 = vpow.pop %v2236
      %v2238 = vmul.f32 %v2200, 1.442695
      %v2239 = vpow.pop %v2238
      %v2240 = vmul.f32 %v2201, 1.442695
      %v2241 = vpow.pop %v2240
      %v2242 = vmul.f32 %v2202, 1.442695
      %v2243 = vpow.pop %v2242
      %v2244 = vmul.f32 %v2203, 1.442695
      %v2245 = vpow.pop %v2244
      %v2246 = vmul.f32 %v2204, 1.442695
      %v2247 = vpow.pop %v2246
      %v2248 = vmul.f32 %v2205, 1.442695
      %v2249 = vpow.pop %v2248
      %v2250 = vmul.f32 %v2206, 1.442695
      %v2251 = vpow.pop %v2250
      %v2252 = vmul.f32 %v2207, 1.442695
      %v2253 = vpow.pop %v2252
      %v2254 = vmul.f32 %v2208, 1.442695
      %v2255 = vpow.pop %v2254
      %v2256 = vmul.f32 %v2209, 1.442695
      %v2257 = vpow.pop %v2256
      %v2258 = vmul.f32 %v2210, 1.442695
      %v2259 = vpow.pop %v2258
      %v2260 = vmul.f32 %v2211, 1.442695
      %v2261 = vpow.pop %v2260
      %v2262 = vmul.f32 %v2212, 1.442695
      %v2263 = vpow.pop %v2262
      %v2264 = vmul.f32 %v2213, 1.442695
      %v2265 = vpow.pop %v2264
      %v2266 = vmul.f32 %v2214, 1.442695
      %v2267 = vpow.pop %v2266
      %v2268 = vmul.f32 %v2215, 1.442695
      %v2269 = vpow.pop %v2268
      %v2270 = vmul.f32 %v2216, 1.442695
      %v2271 = vpow.pop %v2270
      %v2272 = vmul.f32 %v2217, 1.442695
      %v2273 = vpow.pop %v2272
      %v2274 = vmul.f32 %v2218, 1.442695
      %v2275 = vpow.pop %v2274
      %v2276 = vmul.f32 %v2219, 1.442695
      %v2277 = vpow.pop %v2276
      %v2278 = vmul.f32 %v2220, 1.442695
      %v2279 = vpow.pop %v2278
      %v2280 = vmul.f32 %v2221, 1.442695
      %v2281 = vpow.pop %v2280
      %v2282 = vmul.f32 %v2222, 1.442695
      %v2283 = vpow.pop %v2282
      %v2284 = vmul.f32 %v2223, 1.442695
      %v2285 = vpow.pop %v2284
      %v2286 = vmul.f32 %v2224, 1.442695
      %v2287 = vpow.pop %v2286
      %v2288 = vmul.f32 %v2225, 1.442695
      %v2289 = vpow.pop %v2288
      %v2290 = vadd.f32 %v2227, %v2229
      %2291 = vadd.xlane.f32.xlu0 %v2290
      %v2292 = vpop.xlane.xlu0 %2291
      %v2293 = vadd.f32 %v2231, %v2233
      %2294 = vadd.xlane.f32.xlu0 %v2293
      %v2295 = vpop.xlane.xlu0 %2294
      %v2296 = vadd.f32 %v2235, %v2237
      %2297 = vadd.xlane.f32.xlu0 %v2296
      %v2298 = vpop.xlane.xlu0 %2297
      %v2299 = vadd.f32 %v2239, %v2241
      %2300 = vadd.xlane.f32.xlu0 %v2299
      %v2301 = vpop.xlane.xlu0 %2300
      %v2302 = vadd.f32 %v2243, %v2245
      %2303 = vadd.xlane.f32.xlu0 %v2302
      %v2304 = vpop.xlane.xlu0 %2303
      %v2305 = vadd.f32 %v2247, %v2249
      %2306 = vadd.xlane.f32.xlu0 %v2305
      %v2307 = vpop.xlane.xlu0 %2306
      %v2308 = vadd.f32 %v2251, %v2253
      %2309 = vadd.xlane.f32.xlu0 %v2308
      %v2310 = vpop.xlane.xlu0 %2309
      %v2311 = vadd.f32 %v2255, %v2257
      %2312 = vadd.xlane.f32.xlu0 %v2311
      %v2313 = vpop.xlane.xlu0 %2312
      %v2314 = vadd.f32 %v2259, %v2261
      %2315 = vadd.xlane.f32.xlu0 %v2314
      %v2316 = vpop.xlane.xlu0 %2315
      %v2317 = vadd.f32 %v2263, %v2265
      %2318 = vadd.xlane.f32.xlu0 %v2317
      %v2319 = vpop.xlane.xlu0 %2318
      %v2320 = vadd.f32 %v2267, %v2269
      %2321 = vadd.xlane.f32.xlu0 %v2320
      %v2322 = vpop.xlane.xlu0 %2321
      %v2323 = vadd.f32 %v2271, %v2273
      %2324 = vadd.xlane.f32.xlu0 %v2323
      %v2325 = vpop.xlane.xlu0 %2324
      %v2326 = vadd.f32 %v2275, %v2277
      %2327 = vadd.xlane.f32.xlu0 %v2326
      %v2328 = vpop.xlane.xlu0 %2327
      %v2329 = vadd.f32 %v2279, %v2281
      %2330 = vadd.xlane.f32.xlu0 %v2329
      %v2331 = vpop.xlane.xlu0 %2330
      %v2332 = vadd.f32 %v2283, %v2285
      %2333 = vadd.xlane.f32.xlu0 %v2332
      %v2334 = vpop.xlane.xlu0 %2333
      %v2335 = vadd.f32 %v2287, %v2289
      %2336 = vadd.xlane.f32.xlu0 %v2335
      %v2337 = vpop.xlane.xlu0 %2336
      %v2338 = vpack.c.bf16 %v2231, %v2227
      %v2339 = vpack.c.bf16 %v2233, %v2229
      %v2340 = vpack.c.bf16 %v2239, %v2235
      %v2341 = vpack.c.bf16 %v2241, %v2237
      %v2342 = vpack.c.bf16 %v2247, %v2243
      %v2343 = vpack.c.bf16 %v2249, %v2245
      %v2344 = vpack.c.bf16 %v2255, %v2251
      %v2345 = vpack.c.bf16 %v2257, %v2253
      %v2346 = vpack.c.bf16 %v2263, %v2259
      %v2347 = vpack.c.bf16 %v2265, %v2261
      %v2348 = vpack.c.bf16 %v2271, %v2267
      %v2349 = vpack.c.bf16 %v2273, %v2269
      %v2350 = vpack.c.bf16 %v2279, %v2275
      %v2351 = vpack.c.bf16 %v2281, %v2277
      %v2352 = vpack.c.bf16 %v2287, %v2283
      %v2353 = vpack.c.bf16 %v2289, %v2285
      %2354 = vmatprep.subr.bf16.mxu0 0
      %2355 = vmatpush1.bf16.msra.mxu0 %v1334
      %2356 = vmatprep.subr.bf16.mxu0 0
      %2357 = vmatpush1.bf16.msra.mxu0 %v1333
      %2358 = vmatprep.subr.bf16.mxu0 0
      %2359 = vmatpush1.bf16.msra.mxu0 %v1332
      %2360 = vmatprep.subr.bf16.mxu0 0
      %2361 = vmatpush1.bf16.msra.mxu0 %v1331
      %2362 = vmatprep.subr.bf16.mxu0 0
      %2363 = vmatpush1.bf16.msra.mxu0 %v1330
      %2364 = vmatprep.subr.bf16.mxu0 0
      %2365 = vmatpush1.bf16.msra.mxu0 %v1329
      %2366 = vmatprep.subr.bf16.mxu0 0
      %2367 = vmatpush1.bf16.msra.mxu0 %v1328
      %2368 = vmatprep.subr.bf16.mxu0 0
      %2369 = vmatpush1.bf16.msra.mxu0 %v1327
      %2370 = vmatprep.subr.bf16.mxu0 0
      %2371 = vmatpush2.bf16.msra.mxu0 %v1342
      %2372 = vmatprep.subr.bf16.mxu0 0
      %2373 = vmatpush2.bf16.msra.mxu0 %v1341
      %2374 = vmatprep.subr.bf16.mxu0 0
      %2375 = vmatpush2.bf16.msra.mxu0 %v1340
      %2376 = vmatprep.subr.bf16.mxu0 0
      %2377 = vmatpush2.bf16.msra.mxu0 %v1339
      %2378 = vmatprep.subr.bf16.mxu0 0
      %2379 = vmatpush2.bf16.msra.mxu0 %v1338
      %2380 = vmatprep.subr.bf16.mxu0 0
      %2381 = vmatpush2.bf16.msra.mxu0 %v1337
      %2382 = vmatprep.subr.bf16.mxu0 0
      %2383 = vmatpush2.bf16.msra.mxu0 %v1336
      %2384 = vmatprep.subr.bf16.mxu0 0
      %2385 = vmatpush2.bf16.msra.mxu0 %v1335
      %2386 = vmatprep.mubr.bf16.mxu0 %v2339
      %2387 = vmatmul.mubr.bf16.gmra.mxu0 %v2338
      %v2388 = vpop.f32.mrf.mxu0
      %v2389 = vadd.f32 0.0, %v2388
      %v2390 = vpop.f32.mrf.mxu0
      %v2391 = vpop.f32.mrf.mxu0
      %v2392 = vadd.f32 0.0, %v2391
      %v2393 = vpop.f32.mrf.mxu0
      %2394 = vmatprep.mubr.bf16.mxu0 %v2341
      %2395 = vmatmul.mubr.bf16.gmra.mxu0 %v2340
      %v2396 = vpop.f32.mrf.mxu0
      %v2397 = vadd.f32 0.0, %v2396
      %v2398 = vpop.f32.mrf.mxu0
      %v2399 = vpop.f32.mrf.mxu0
      %v2400 = vadd.f32 0.0, %v2399
      %v2401 = vpop.f32.mrf.mxu0
      %2402 = vmatprep.mubr.bf16.mxu0 %v2343
      %2403 = vmatmul.mubr.bf16.gmra.mxu0 %v2342
      %v2404 = vpop.f32.mrf.mxu0
      %v2405 = vadd.f32 0.0, %v2404
      %v2406 = vpop.f32.mrf.mxu0
      %v2407 = vpop.f32.mrf.mxu0
      %v2408 = vadd.f32 0.0, %v2407
      %v2409 = vpop.f32.mrf.mxu0
      %2410 = vmatprep.mubr.bf16.mxu0 %v2345
      %2411 = vmatmul.mubr.bf16.gmra.mxu0 %v2344
      %v2412 = vpop.f32.mrf.mxu0
      %v2413 = vadd.f32 0.0, %v2412
      %v2414 = vpop.f32.mrf.mxu0
      %v2415 = vpop.f32.mrf.mxu0
      %v2416 = vadd.f32 0.0, %v2415
      %v2417 = vpop.f32.mrf.mxu0
      %2418 = vmatprep.mubr.bf16.mxu0 %v2347
      %2419 = vmatmul.mubr.bf16.gmra.mxu0 %v2346
      %v2420 = vpop.f32.mrf.mxu0
      %v2421 = vadd.f32 0.0, %v2420
      %v2422 = vpop.f32.mrf.mxu0
      %v2423 = vpop.f32.mrf.mxu0
      %v2424 = vadd.f32 0.0, %v2423
      %v2425 = vpop.f32.mrf.mxu0
      %2426 = vmatprep.mubr.bf16.mxu0 %v2349
      %2427 = vmatmul.mubr.bf16.gmra.mxu0 %v2348
      %v2428 = vpop.f32.mrf.mxu0
      %v2429 = vadd.f32 0.0, %v2428
      %v2430 = vpop.f32.mrf.mxu0
      %v2431 = vpop.f32.mrf.mxu0
      %v2432 = vadd.f32 0.0, %v2431
      %v2433 = vpop.f32.mrf.mxu0
      %2434 = vmatprep.mubr.bf16.mxu0 %v2351
      %2435 = vmatmul.mubr.bf16.gmra.mxu0 %v2350
      %v2436 = vpop.f32.mrf.mxu0
      %v2437 = vadd.f32 0.0, %v2436
      %v2438 = vpop.f32.mrf.mxu0
      %v2439 = vpop.f32.mrf.mxu0
      %v2440 = vadd.f32 0.0, %v2439
      %v2441 = vpop.f32.mrf.mxu0
      %2442 = vmatprep.mubr.bf16.mxu0 %v2353
      %2443 = vmatmul.mubr.bf16.gmra.mxu0 %v2352
      %v2444 = vpop.f32.mrf.mxu0
      %v2445 = vadd.f32 0.0, %v2444
      %v2446 = vpop.f32.mrf.mxu0
      %v2447 = vpop.f32.mrf.mxu0
      %v2448 = vadd.f32 0.0, %v2447
      %v2449 = vpop.f32.mrf.mxu0
      %2450 = vdwg.mxu0
      %v2451 = vrcp.pop %v2292
      %v2452 = vrcp.pop %v2295
      %v2453 = vrcp.pop %v2298
      %v2454 = vrcp.pop %v2301
      %v2455 = vrcp.pop %v2304
      %v2456 = vrcp.pop %v2307
      %v2457 = vrcp.pop %v2310
      %v2458 = vrcp.pop %v2313
      %v2459 = vrcp.pop %v2316
      %v2460 = vrcp.pop %v2319
      %v2461 = vrcp.pop %v2322
      %v2462 = vrcp.pop %v2325
      %v2463 = vrcp.pop %v2328
      %v2464 = vrcp.pop %v2331
      %v2465 = vrcp.pop %v2334
      %v2466 = vrcp.pop %v2337
      %v2467 = vmul.f32 %v2389, %v2451
      %v2468 = vmul.f32 %v2392, %v2452
      %v2469 = vmul.f32 %v2397, %v2453
      %v2470 = vmul.f32 %v2400, %v2454
      %v2471 = vmul.f32 %v2405, %v2455
      %v2472 = vmul.f32 %v2408, %v2456
      %v2473 = vmul.f32 %v2413, %v2457
      %v2474 = vmul.f32 %v2416, %v2458
      %v2475 = vmul.f32 %v2421, %v2459
      %v2476 = vmul.f32 %v2424, %v2460
      %v2477 = vmul.f32 %v2429, %v2461
      %v2478 = vmul.f32 %v2432, %v2462
      %v2479 = vmul.f32 %v2437, %v2463
      %v2480 = vmul.f32 %v2440, %v2464
      %v2481 = vmul.f32 %v2445, %v2465
      %v2482 = vmul.f32 %v2448, %v2466
      %v2483 = vpack.c.bf16 %v2468, %v2467
      %v2484 = vpack.c.bf16 %v2470, %v2469
      %v2485 = vpack.c.bf16 %v2472, %v2471
      %v2486 = vpack.c.bf16 %v2474, %v2473
      %v2487 = vpack.c.bf16 %v2476, %v2475
      %v2488 = vpack.c.bf16 %v2478, %v2477
      %v2489 = vpack.c.bf16 %v2480, %v2479
      %v2490 = vpack.c.bf16 %v2482, %v2481
      %2491 = vmatprep.subr.bf16.mxu0 0
      %2492 = vmatpush1.bf16.msra.mxu0 %v1863
      %2493 = vmatprep.subr.bf16.mxu0 0
      %2494 = vmatpush1.bf16.msra.mxu0 %v1862
      %2495 = vmatprep.subr.bf16.mxu0 0
      %2496 = vmatpush1.bf16.msra.mxu0 %v1861
      %2497 = vmatprep.subr.bf16.mxu0 0
      %2498 = vmatpush1.bf16.msra.mxu0 %v1860
      %2499 = vmatprep.subr.bf16.mxu0 0
      %2500 = vmatpush1.bf16.msra.mxu0 %v1859
      %2501 = vmatprep.subr.bf16.mxu0 0
      %2502 = vmatpush1.bf16.msra.mxu0 %v1858
      %2503 = vmatprep.subr.bf16.mxu0 0
      %2504 = vmatpush1.bf16.msra.mxu0 %v1857
      %2505 = vmatprep.subr.bf16.mxu0 0
      %2506 = vmatpush1.bf16.msra.mxu0 %v1856
      %2507 = vmatprep.subr.bf16.mxu0 0
      %2508 = vmatpush2.bf16.msra.mxu0 0
      %2509 = vmatprep.subr.bf16.mxu0 0
      %2510 = vmatpush2.bf16.msra.mxu0 0
      %2511 = vmatprep.subr.bf16.mxu0 0
      %2512 = vmatpush2.bf16.msra.mxu0 0
      %2513 = vmatprep.subr.bf16.mxu0 0
      %2514 = vmatpush2.bf16.msra.mxu0 0
      %2515 = vmatprep.subr.bf16.mxu0 0
      %2516 = vmatpush2.bf16.msra.mxu0 0
      %2517 = vmatprep.subr.bf16.mxu0 0
      %2518 = vmatpush2.bf16.msra.mxu0 0
      %2519 = vmatprep.subr.bf16.mxu0 0
      %2520 = vmatpush2.bf16.msra.mxu0 0
      %2521 = vmatprep.subr.bf16.mxu0 0
      %2522 = vmatpush2.bf16.msra.mxu0 0
      %2523 = vmatprep.mubr.bf16.mxu0 0
      %2524 = vmatmul.mubr.bf16.gmra.mxu0 %v2483
      %v2525 = vpop.f32.mrf.mxu0
      %v2526 = vadd.f32 %v1822, %v2525
      %v2527 = vpop.f32.mrf.mxu0
      %v2528 = vpop.f32.mrf.mxu0
      %v2529 = vadd.f32 %v1822, %v2528
      %v2530 = vpop.f32.mrf.mxu0
      %2531 = vmatprep.mubr.bf16.mxu0 0
      %2532 = vmatmul.mubr.bf16.gmra.mxu0 %v2484
      %v2533 = vpop.f32.mrf.mxu0
      %v2534 = vadd.f32 %v1822, %v2533
      %v2535 = vpop.f32.mrf.mxu0
      %v2536 = vpop.f32.mrf.mxu0
      %v2537 = vadd.f32 %v1822, %v2536
      %v2538 = vpop.f32.mrf.mxu0
      %2539 = vmatprep.mubr.bf16.mxu0 0
      %2540 = vmatmul.mubr.bf16.gmra.mxu0 %v2485
      %v2541 = vpop.f32.mrf.mxu0
      %v2542 = vadd.f32 %v1822, %v2541
      %v2543 = vpop.f32.mrf.mxu0
      %v2544 = vpop.f32.mrf.mxu0
      %v2545 = vadd.f32 %v1822, %v2544
      %v2546 = vpop.f32.mrf.mxu0
      %2547 = vmatprep.mubr.bf16.mxu0 0
      %2548 = vmatmul.mubr.bf16.gmra.mxu0 %v2486
      %v2549 = vpop.f32.mrf.mxu0
      %v2550 = vadd.f32 %v1822, %v2549
      %v2551 = vpop.f32.mrf.mxu0
      %v2552 = vpop.f32.mrf.mxu0
      %v2553 = vadd.f32 %v1822, %v2552
      %v2554 = vpop.f32.mrf.mxu0
      %2555 = vmatprep.mubr.bf16.mxu0 0
      %2556 = vmatmul.mubr.bf16.gmra.mxu0 %v2487
      %v2557 = vpop.f32.mrf.mxu0
      %v2558 = vadd.f32 %v1822, %v2557
      %v2559 = vpop.f32.mrf.mxu0
      %v2560 = vpop.f32.mrf.mxu0
      %v2561 = vadd.f32 %v1822, %v2560
      %v2562 = vpop.f32.mrf.mxu0
      %2563 = vmatprep.mubr.bf16.mxu0 0
      %2564 = vmatmul.mubr.bf16.gmra.mxu0 %v2488
      %v2565 = vpop.f32.mrf.mxu0
      %v2566 = vadd.f32 %v1822, %v2565
      %v2567 = vpop.f32.mrf.mxu0
      %v2568 = vpop.f32.mrf.mxu0
      %v2569 = vadd.f32 %v1822, %v2568
      %v2570 = vpop.f32.mrf.mxu0
      %2571 = vmatprep.mubr.bf16.mxu0 0
      %2572 = vmatmul.mubr.bf16.gmra.mxu0 %v2489
      %v2573 = vpop.f32.mrf.mxu0
      %v2574 = vadd.f32 %v1822, %v2573
      %v2575 = vpop.f32.mrf.mxu0
      %v2576 = vpop.f32.mrf.mxu0
      %v2577 = vadd.f32 %v1822, %v2576
      %v2578 = vpop.f32.mrf.mxu0
      %2579 = vmatprep.mubr.bf16.mxu0 0
      %2580 = vmatmul.mubr.bf16.gmra.mxu0 %v2490
      %v2581 = vpop.f32.mrf.mxu0
      %v2582 = vadd.f32 %v1822, %v2581
      %v2583 = vpop.f32.mrf.mxu0
      %v2584 = vpop.f32.mrf.mxu0
      %v2585 = vadd.f32 %v1822, %v2584
      %v2586 = vpop.f32.mrf.mxu0
      %2587 = vdwg.mxu0
      %v2588 = vadd.f32 %v387, %v2526
      %v2589 = vadd.f32 %v388, %v2529
      %v2590 = vadd.f32 %v389, %v2534
      %v2591 = vadd.f32 %v390, %v2537
      %v2592 = vadd.f32 %v391, %v2542
      %v2593 = vadd.f32 %v392, %v2545
      %v2594 = vadd.f32 %v393, %v2550
      %v2595 = vadd.f32 %v394, %v2553
      %v2596 = vadd.f32 %v395, %v2558
      %v2597 = vadd.f32 %v396, %v2561
      %v2598 = vadd.f32 %v397, %v2566
      %v2599 = vadd.f32 %v398, %v2569
      %v2600 = vadd.f32 %v399, %v2574
      %v2601 = vadd.f32 %v400, %v2577
      %v2602 = vadd.f32 %v401, %v2582
      %v2603 = vadd.f32 %v402, %v2585
      %2604 = vxpose.xlu0.b32.start [1/16] %v2588, 128
      %2605 = vxpose.xlu0.b32.cont [2/16] %v2589, 128
      %2606 = vxpose.xlu0.b32.cont [3/16] %v2590, 128
      %2607 = vxpose.xlu0.b32.cont [4/16] %v2591, 128
      %2608 = vxpose.xlu0.b32.cont [5/16] %v2592, 128
      %2609 = vxpose.xlu0.b32.cont [6/16] %v2593, 128
      %2610 = vxpose.xlu0.b32.cont [7/16] %v2594, 128
      %2611 = vxpose.xlu0.b32.cont [8/16] %v2595, 128
      %2612 = vxpose.xlu0.b32.cont [9/16] %v2596, 128
      %2613 = vxpose.xlu0.b32.cont [10/16] %v2597, 128
      %2614 = vxpose.xlu0.b32.cont [11/16] %v2598, 128
      %2615 = vxpose.xlu0.b32.cont [12/16] %v2599, 128
      %2616 = vxpose.xlu0.b32.cont [13/16] %v2600, 128
      %2617 = vxpose.xlu0.b32.cont [14/16] %v2601, 128
      %2618 = vxpose.xlu0.b32.cont [15/16] %v2602, 128
      %2619 = vxpose.xlu0.b32.end [16/16] %v2603, 128
      %v2620 = vpop.trf.xlu0
      %v2621 = vpop.trf.xlu0
      %v2622 = vpop.trf.xlu0
      %v2623 = vpop.trf.xlu0
      %v2624 = vpop.trf.xlu0
      %v2625 = vpop.trf.xlu0
      %v2626 = vpop.trf.xlu0
      %v2627 = vpop.trf.xlu0
      %v2628 = vpop.trf.xlu0
      %v2629 = vpop.trf.xlu0
      %v2630 = vpop.trf.xlu0
      %v2631 = vpop.trf.xlu0
      %v2632 = vpop.trf.xlu0
      %v2633 = vpop.trf.xlu0
      %v2634 = vpop.trf.xlu0
      %v2635 = vpop.trf.xlu0
      %2636 = vst [vmem:[%s305 + $0x8] sm:$0xff] %v2620
      %2637 = vst [vmem:[%s305 + $0x18] sm:$0xff] %v2621
      %2638 = vst [vmem:[%s305 + $0x28] sm:$0xff] %v2622
      %2639 = vst [vmem:[%s305 + $0x38] sm:$0xff] %v2623
      %2640 = vst [vmem:[%s305 + $0x48] sm:$0xff] %v2624
      %2641 = vst [vmem:[%s305 + $0x58] sm:$0xff] %v2625
      %2642 = vst [vmem:[%s305 + $0x68] sm:$0xff] %v2626
      %2643 = vst [vmem:[%s305 + $0x78] sm:$0xff] %v2627
      %2644 = vst [vmem:[%s305 + $0x88] sm:$0xff] %v2628
      %2645 = vst [vmem:[%s305 + $0x98] sm:$0xff] %v2629
      %2646 = vst [vmem:[%s305 + $0xa8] sm:$0xff] %v2630
      %2647 = vst [vmem:[%s305 + $0xb8] sm:$0xff] %v2631
      %2648 = vst [vmem:[%s305 + $0xc8] sm:$0xff] %v2632
      %2649 = vst [vmem:[%s305 + $0xd8] sm:$0xff] %v2633
      %2650 = vst [vmem:[%s305 + $0xe8] sm:$0xff] %v2634
      %2651 = vst [vmem:[%s305 + $0xf8] sm:$0xff] %v2635
      %p2652 = scmp.lt.s32.totalorder %s19, 1
      %s2653 = scalar_select %p2652, %s19, 1
      %s2654 = smul.addr %s2653, 32
      %s2655 = smul.addr %s2654, 8
      %s2656 = scalar_lea.vmem %s8, %s2655
      // Predicated region
      $region53: #{spatial_self_attention.1} parent=51 // pred_check
        %p2657 = pneg %p210
      $region54: #{spatial_self_attention.1} parent=51 // pred_check_branch
        %2659 = sbr.rel (%p2657) target = $region56
      $region55: #{spatial_self_attention.1} parent=51 // pred_region
        _
      $region56: #{spatial_self_attention.1} parent=51 // pred_fallthru
        _
    $region52: #{spatial_self_attention.1} parent=5 // pred_fallthru
      _
    %p2660 = scmp.le.s32.totalorder 2, %s14
    // Predicated region
    $region57: #{spatial_self_attention.1} parent=5 // pred_check
      %p2661 = pneg %p2660
    $region58: #{spatial_self_attention.1} parent=5 // pred_check_branch
      %2663 = sbr.rel (%p2661) target = $region60
    $region59: #{spatial_self_attention.1} parent=5 // pred_region
      %s2664 = ssub.s32 %s14, 2
      // Predicated region
      $region61: #{spatial_self_attention.1} parent=59 // pred_check
        %p2665 = pneg %p216
      $region62: #{spatial_self_attention.1} parent=59 // pred_check_branch
        %2667 = sbr.rel (%p2665) target = $region64
      $region63: #{spatial_self_attention.1} parent=59 // pred_region
        %p2668 = scmp.lt.s32.totalorder %s20, 1
        %s2669 = scalar_select %p2668, %s20, 1
        %s2670 = smul.addr %s2669, 32
        %s2671 = smul.addr %s2670, 8
        %s2672 = scalar_lea.vmem %s8, %s2671
      $region64: #{spatial_self_attention.1} parent=59 // pred_fallthru
        _
    $region60: #{spatial_self_attention.1} parent=5 // pred_fallthru
      _
  $region6: #{spatial_self_attention.1} parent=0 // loop_footer
    %s18 = sadd.s32 1, %s14
  $region7: #{spatial_self_attention.1} parent=0 // loop_footer_branch
    %13 = sbr.rel target = $region3
  $region8: #{spatial_self_attention.1} parent=0 // loop_exit
    _

</llo_original>
